<compile_context>
chip_gen: v7x
topology: tpu7x:2x2x1
jax: 0.10.0
libtpu: 0.0.40
codegen_flags: <defaults>
</compile_context>

<pallas_src>
import functools

import jax
import jax.numpy as jnp
from jax.experimental import pallas as pl
from jax.experimental.pallas import tpu as pltpu

LANE = 128      # vreg lane width (last dim)
SUBLANE = 8     # vreg sublane width (second-to-last dim)


def _round_up(x, m):
    return (x + m - 1) // m * m


def _deepnet_fused_kernel(*refs, num_layers, compute_dtype):
    """Whole MLP for one batch tile.

    refs = (x_ref, w0, b0, w1, b1, ..., w{L-1}, b{L-1}, o_ref)
      x_ref: (tm, Kp0)   lane-dense padded activation tile
      w_i:   (Kp_i, Np_i) per-layer zero-padded weight (VMEM-resident)
      b_i:   (1, Np_i)    per-layer zero-padded bias
      o_ref: (tm, Np_last)

    Zero padding keeps the math exact: padded weight ROWS are zero, so the
    sigmoid(0)=0.5 garbage living in padded activation lanes never reaches a
    real output lane; padded output lanes are sliced off in the wrapper.
    """
    x_ref = refs[0]
    o_ref = refs[1 + 2 * num_layers]
    h = x_ref[...].astype(jnp.float32)
    for i in range(num_layers):              # static unroll: L is tiny & known
        w_ref = refs[1 + 2 * i]
        b_ref = refs[2 + 2 * i]
        y = jnp.dot(h.astype(compute_dtype), w_ref[...].astype(compute_dtype),
                    preferred_element_type=jnp.float32)
        y = y + b_ref[...].astype(jnp.float32)      # (1, Np) broadcasts over rows
        if i < num_layers - 1:
            # sigmoid(y) = 0.5 * tanh(0.5 * y) + 0.5  -> one EUP op + one fma.
            h = 0.5 * jnp.tanh(0.5 * y) + 0.5
        else:
            h = y
    o_ref[...] = h.astype(o_ref.dtype)


def pack_deepnet_params(params, compute_dtype=jnp.bfloat16):
    """Pad each layer's (w, b) to lane-dense shapes ONCE (call at init time).

    w: (K, N) -> (round_up(K,128), round_up(N,128)) in compute_dtype (bf16)
    b: (N,)   -> (1, round_up(N,128)) in f32
    """
    packed = []
    for (w, b) in params:
        k, n = w.shape
        kp, npad = _round_up(k, LANE), _round_up(n, LANE)
        wp = jnp.pad(w.astype(compute_dtype), ((0, kp - k), (0, npad - n)))
        bp = jnp.pad(b.astype(jnp.float32), (0, npad - n)).reshape(1, npad)
        packed.append((wp, bp))
    return packed


def deepnet_forward(x, packed_params, out_features, *, block_m=256):
    """Fused forward pass of the whole MLP in one pallas_call."""
    M, in_features = x.shape
    L = len(packed_params)
    compute_dtype = packed_params[0][0].dtype
    kp0 = packed_params[0][0].shape[0]
    np_last = packed_params[-1][0].shape[1]
    assert in_features <= kp0

    # Batch tiling: guarantee >= 2 grid steps whenever the batch allows it so
    # the "parallel" axis can shard across v7x's two TensorCores and pipeline
    # HBM loads; cap the tile at block_m (256 matches the v6e/v7x MXU rows).
    m_pad = _round_up(max(M, 1), SUBLANE)
    tm = min(block_m, max(SUBLANE, _round_up(m_pad // 2, SUBLANE)))
    m_pad = _round_up(m_pad, tm)

    x_pad = jnp.pad(x.astype(jnp.float32),
                    ((0, m_pad - M), (0, kp0 - in_features)))

    flat_params = []
    for (w, b) in packed_params:
        flat_params += [w, b]

    # Explicit VMEM budget (never below the most conservative default 32 MiB;
    # scale up with the real footprint when layers grow).
    w_bytes = sum(int(w.size) * w.dtype.itemsize for w, _ in packed_params)
    b_bytes = sum(int(b.size) * b.dtype.itemsize for _, b in packed_params)
    widest = max([kp0, np_last] + [w.shape[1] for w, _ in packed_params])
    act_bytes = tm * widest * 4
    est = 2 * (w_bytes + b_bytes) + 4 * act_bytes + 8 * act_bytes
    vmem_limit = max(32 * 1024 * 1024, int(1.25 * est))
    # TODO(synk): once 2 * sum(Kp*Np) weight bytes approach the v7x 64 MiB VMEM
    # ceiling, switch to a layer-streaming grid axis (grid=(m, L), L innermost
    # "arbitrary", activation carried in VMEM scratch, store under
    # pl.when(l == L-1)) plus a K-reduction axis for very wide hidden layers,
    # instead of keeping every layer resident.

    kernel = functools.partial(_deepnet_fused_kernel, num_layers=L,
                               compute_dtype=compute_dtype)

    def build(weight_pipeline_mode):
        in_specs = [pl.BlockSpec((tm, kp0), lambda m: (m, 0))]
        for (w, _b) in packed_params:
            kp, npad = w.shape
            if weight_pipeline_mode is None:
                in_specs.append(pl.BlockSpec((kp, npad), lambda m: (0, 0)))
                in_specs.append(pl.BlockSpec((1, npad), lambda m: (0, 0)))
            else:
                in_specs.append(pl.BlockSpec(
                    (kp, npad), lambda m: (0, 0),
                    pipeline_mode=weight_pipeline_mode))
                in_specs.append(pl.BlockSpec(
                    (1, npad), lambda m: (0, 0),
                    pipeline_mode=weight_pipeline_mode))
        return pl.pallas_call(
            kernel,
            out_shape=jax.ShapeDtypeStruct((m_pad, np_last), jnp.float32),
            grid_spec=pltpu.PrefetchScalarGridSpec(
                num_scalar_prefetch=0,
                grid=(m_pad // tm,),
                in_specs=in_specs,
                out_specs=pl.BlockSpec((tm, np_last), lambda m: (m, 0)),
            ),
            compiler_params=pltpu.CompilerParams(
                dimension_semantics=("parallel",),
                vmem_limit_bytes=vmem_limit),
        )

    try:
        # Constant index_map + Buffered(1): keep resident weights single-buffered.
        out_pad = build(pl.Buffered(1))(x_pad, *flat_params)
    except Exception:
        # This JAX build rejects single-buffering -> fall back to default
        # double-buffered pipelining (correct, just 2x weight VMEM).
        out_pad = build(None)(x_pad, *flat_params)

    return out_pad[:M, :out_features]


def init_deepnet_params(key, input_size, hidden_size, output_size, num_layers):
    """Xavier-uniform weights, zero biases (matches the PyTorch __init__)."""
    dims = [input_size] + [hidden_size] * (num_layers - 1) + [output_size]
    params = []
    for i in range(num_layers):
        fan_in, fan_out = dims[i], dims[i + 1]
        key, sub = jax.random.split(key)
        bound = (6.0 / (fan_in + fan_out)) ** 0.5
        w = jax.random.uniform(sub, (fan_in, fan_out), jnp.float32,
                               minval=-bound, maxval=bound)
        b = jnp.zeros((fan_out,), jnp.float32)
        params.append((w, b))
    return params


def deepnet_reference(x, params, compute_dtype=jnp.float32):
    """Pure-JAX reference: sigmoid after every layer except the last."""
    n = len(params)
    h = x.astype(jnp.float32)
    for i, (w, b) in enumerate(params):
        y = jnp.dot(h.astype(compute_dtype), w.astype(compute_dtype),
                    preferred_element_type=jnp.float32) + b.astype(jnp.float32)
        h = jax.nn.sigmoid(y) if i < n - 1 else y
    return h


if __name__ == "__main__":
    # Small shapes consistent with the module: batch=8, input=16, hidden=32, out=8
    batch, input_size, hidden_size, output_size, num_layers = 8, 16, 32, 8, 4

    key = jax.random.PRNGKey(0)
    pkey, xkey = jax.random.split(key)
    params = init_deepnet_params(pkey, input_size, hidden_size, output_size,
                                 num_layers)
    x = jax.random.normal(xkey, (batch, input_size), dtype=jnp.float32)

    packed = pack_deepnet_params(params)          # done once, "at init"
    out = deepnet_forward(x, packed, output_size)
    out = jax.block_until_ready(out)

    assert out.shape == (batch, output_size)
    # bf16 MXU operands: compare against a bf16-cast reference (tight-ish) and
    # the pure f32 reference (loose, bf16-quantization-sized tolerance).
    ref_bf16 = deepnet_reference(x, params, compute_dtype=jnp.bfloat16)
    ref_f32 = deepnet_reference(x, params, compute_dtype=jnp.float32)
    assert jnp.allclose(out, ref_bf16, atol=1e-2, rtol=1e-2), float(
        jnp.max(jnp.abs(out - ref_bf16)))
    assert jnp.allclose(out, ref_f32, atol=5e-2, rtol=5e-2), float(
        jnp.max(jnp.abs(out - ref_f32)))

    print("KERNEL_OK")
</pallas_src>

<mosaic_0001>
module attributes {stable_mosaic.version = 11 : i64} {
  func.func @_deepnet_fused_kernel(%arg0: i32, %arg1: memref<8x128xf32, #tpu.memory_space<vmem>>, %arg2: memref<128x128xbf16, #tpu.memory_space<vmem>>, %arg3: memref<1x128xf32, #tpu.memory_space<vmem>>, %arg4: memref<128x128xbf16, #tpu.memory_space<vmem>>, %arg5: memref<1x128xf32, #tpu.memory_space<vmem>>, %arg6: memref<128x128xbf16, #tpu.memory_space<vmem>>, %arg7: memref<1x128xf32, #tpu.memory_space<vmem>>, %arg8: memref<128x128xbf16, #tpu.memory_space<vmem>>, %arg9: memref<1x128xf32, #tpu.memory_space<vmem>>, %arg10: memref<8x128xf32, #tpu.memory_space<vmem>>) attributes {dimension_semantics = [#tpu.dimension_semantics<parallel>], iteration_bounds = array<i64: 1>, scalar_prefetch = 0 : i64, scratch_operands = 0 : i64, tpu.core_type = #tpu.core_type<tc>, window_params = [{transform_indices = @transform_0, window_bounds = array<i64: 8, 128>}, {pipeline_mode = #tpu.pipeline_mode<synchronous>, transform_indices = @transform_1, window_bounds = array<i64: 128, 128>}, {pipeline_mode = #tpu.pipeline_mode<synchronous>, transform_indices = @transform_2, window_bounds = array<i64: 1, 128>}, {pipeline_mode = #tpu.pipeline_mode<synchronous>, transform_indices = @transform_3, window_bounds = array<i64: 128, 128>}, {pipeline_mode = #tpu.pipeline_mode<synchronous>, transform_indices = @transform_4, window_bounds = array<i64: 1, 128>}, {pipeline_mode = #tpu.pipeline_mode<synchronous>, transform_indices = @transform_5, window_bounds = array<i64: 128, 128>}, {pipeline_mode = #tpu.pipeline_mode<synchronous>, transform_indices = @transform_6, window_bounds = array<i64: 1, 128>}, {pipeline_mode = #tpu.pipeline_mode<synchronous>, transform_indices = @transform_7, window_bounds = array<i64: 128, 128>}, {pipeline_mode = #tpu.pipeline_mode<synchronous>, transform_indices = @transform_8, window_bounds = array<i64: 1, 128>}, {transform_indices = @transform_9, window_bounds = array<i64: 8, 128>}]} {
    %c0 = arith.constant 0 : index
    %c0_0 = arith.constant 0 : index
    %0 = vector.load %arg1[%c0, %c0_0] : memref<8x128xf32, #tpu.memory_space<vmem>>, vector<8x128xf32>
    %1 = arith.truncf %0 : vector<8x128xf32> to vector<8x128xbf16>
    %c0_1 = arith.constant 0 : index
    %c0_2 = arith.constant 0 : index
    %2 = vector.load %arg2[%c0_1, %c0_2] : memref<128x128xbf16, #tpu.memory_space<vmem>>, vector<128x128xbf16>
    %cst = arith.constant dense<0.000000e+00> : vector<8x128xf32>
    %3 = tpu.matmul %1, %2, %cst {dimension_numbers = #tpu.dot_dimension_numbers<[1], [0], [0], [1], [0, 0, 1, 1], [], []>} : vector<8x128xbf16>, vector<128x128xbf16>, vector<8x128xf32> -> vector<8x128xf32>
    %c0_3 = arith.constant 0 : index
    %c0_4 = arith.constant 0 : index
    %4 = vector.load %arg3[%c0_3, %c0_4] : memref<1x128xf32, #tpu.memory_space<vmem>>, vector<1x128xf32>
    %5 = vector.broadcast %4 : vector<1x128xf32> to vector<8x128xf32>
    %6 = arith.addf %3, %5 : vector<8x128xf32>
    %cst_5 = arith.constant 5.000000e-01 : f32
    %7 = vector.broadcast %cst_5 : f32 to vector<8x128xf32>
    %8 = arith.mulf %7, %6 : vector<8x128xf32>
    %9 = math.tanh %8 : vector<8x128xf32>
    %cst_6 = arith.constant 5.000000e-01 : f32
    %10 = vector.broadcast %cst_6 : f32 to vector<8x128xf32>
    %11 = arith.mulf %10, %9 : vector<8x128xf32>
    %cst_7 = arith.constant 5.000000e-01 : f32
    %12 = vector.broadcast %cst_7 : f32 to vector<8x128xf32>
    %13 = arith.addf %11, %12 : vector<8x128xf32>
    %14 = arith.truncf %13 : vector<8x128xf32> to vector<8x128xbf16>
    %c0_8 = arith.constant 0 : index
    %c0_9 = arith.constant 0 : index
    %15 = vector.load %arg4[%c0_8, %c0_9] : memref<128x128xbf16, #tpu.memory_space<vmem>>, vector<128x128xbf16>
    %cst_10 = arith.constant dense<0.000000e+00> : vector<8x128xf32>
    %16 = tpu.matmul %14, %15, %cst_10 {dimension_numbers = #tpu.dot_dimension_numbers<[1], [0], [0], [1], [0, 0, 1, 1], [], []>} : vector<8x128xbf16>, vector<128x128xbf16>, vector<8x128xf32> -> vector<8x128xf32>
    %c0_11 = arith.constant 0 : index
    %c0_12 = arith.constant 0 : index
    %17 = vector.load %arg5[%c0_11, %c0_12] : memref<1x128xf32, #tpu.memory_space<vmem>>, vector<1x128xf32>
    %18 = vector.broadcast %17 : vector<1x128xf32> to vector<8x128xf32>
    %19 = arith.addf %16, %18 : vector<8x128xf32>
    %cst_13 = arith.constant 5.000000e-01 : f32
    %20 = vector.broadcast %cst_13 : f32 to vector<8x128xf32>
    %21 = arith.mulf %20, %19 : vector<8x128xf32>
    %22 = math.tanh %21 : vector<8x128xf32>
    %cst_14 = arith.constant 5.000000e-01 : f32
    %23 = vector.broadcast %cst_14 : f32 to vector<8x128xf32>
    %24 = arith.mulf %23, %22 : vector<8x128xf32>
    %cst_15 = arith.constant 5.000000e-01 : f32
    %25 = vector.broadcast %cst_15 : f32 to vector<8x128xf32>
    %26 = arith.addf %24, %25 : vector<8x128xf32>
    %27 = arith.truncf %26 : vector<8x128xf32> to vector<8x128xbf16>
    %c0_16 = arith.constant 0 : index
    %c0_17 = arith.constant 0 : index
    %28 = vector.load %arg6[%c0_16, %c0_17] : memref<128x128xbf16, #tpu.memory_space<vmem>>, vector<128x128xbf16>
    %cst_18 = arith.constant dense<0.000000e+00> : vector<8x128xf32>
    %29 = tpu.matmul %27, %28, %cst_18 {dimension_numbers = #tpu.dot_dimension_numbers<[1], [0], [0], [1], [0, 0, 1, 1], [], []>} : vector<8x128xbf16>, vector<128x128xbf16>, vector<8x128xf32> -> vector<8x128xf32>
    %c0_19 = arith.constant 0 : index
    %c0_20 = arith.constant 0 : index
    %30 = vector.load %arg7[%c0_19, %c0_20] : memref<1x128xf32, #tpu.memory_space<vmem>>, vector<1x128xf32>
    %31 = vector.broadcast %30 : vector<1x128xf32> to vector<8x128xf32>
    %32 = arith.addf %29, %31 : vector<8x128xf32>
    %cst_21 = arith.constant 5.000000e-01 : f32
    %33 = vector.broadcast %cst_21 : f32 to vector<8x128xf32>
    %34 = arith.mulf %33, %32 : vector<8x128xf32>
    %35 = math.tanh %34 : vector<8x128xf32>
    %cst_22 = arith.constant 5.000000e-01 : f32
    %36 = vector.broadcast %cst_22 : f32 to vector<8x128xf32>
    %37 = arith.mulf %36, %35 : vector<8x128xf32>
    %cst_23 = arith.constant 5.000000e-01 : f32
    %38 = vector.broadcast %cst_23 : f32 to vector<8x128xf32>
    %39 = arith.addf %37, %38 : vector<8x128xf32>
    %40 = arith.truncf %39 : vector<8x128xf32> to vector<8x128xbf16>
    %c0_24 = arith.constant 0 : index
    %c0_25 = arith.constant 0 : index
    %41 = vector.load %arg8[%c0_24, %c0_25] : memref<128x128xbf16, #tpu.memory_space<vmem>>, vector<128x128xbf16>
    %cst_26 = arith.constant dense<0.000000e+00> : vector<8x128xf32>
    %42 = tpu.matmul %40, %41, %cst_26 {dimension_numbers = #tpu.dot_dimension_numbers<[1], [0], [0], [1], [0, 0, 1, 1], [], []>} : vector<8x128xbf16>, vector<128x128xbf16>, vector<8x128xf32> -> vector<8x128xf32>
    %c0_27 = arith.constant 0 : index
    %c0_28 = arith.constant 0 : index
    %43 = vector.load %arg9[%c0_27, %c0_28] : memref<1x128xf32, #tpu.memory_space<vmem>>, vector<1x128xf32>
    %44 = vector.broadcast %43 : vector<1x128xf32> to vector<8x128xf32>
    %45 = arith.addf %42, %44 : vector<8x128xf32>
    %c0_29 = arith.constant 0 : index
    %c0_30 = arith.constant 0 : index
    %46 = vector.load %arg10[%c0_29, %c0_30] : memref<8x128xf32, #tpu.memory_space<vmem>>, vector<8x128xf32>
    tpu.vector_store %arg10[%c0_29, %c0_30], %45 {strides = array<i32>} : memref<8x128xf32, #tpu.memory_space<vmem>>, vector<8x128xf32>,
    return
  }
  func.func @transform_0(%arg0: i32) -> (i32, i32) {
    %c0_i32 = arith.constant 0 : i32
    %c0_i32_0 = arith.constant 0 : i32
    return %arg0, %c0_i32 : i32, i32
  }
  func.func @transform_1(%arg0: i32) -> (i32, i32) {
    %c0_i32 = arith.constant 0 : i32
    %c0_i32_0 = arith.constant 0 : i32
    %c0_i32_1 = arith.constant 0 : i32
    return %c0_i32, %c0_i32_0 : i32, i32
  }
  func.func @transform_2(%arg0: i32) -> (i32, i32) {
    %c0_i32 = arith.constant 0 : i32
    %c0_i32_0 = arith.constant 0 : i32
    %c0_i32_1 = arith.constant 0 : i32
    return %c0_i32, %c0_i32_0 : i32, i32
  }
  func.func @transform_3(%arg0: i32) -> (i32, i32) {
    %c0_i32 = arith.constant 0 : i32
    %c0_i32_0 = arith.constant 0 : i32
    %c0_i32_1 = arith.constant 0 : i32
    return %c0_i32, %c0_i32_0 : i32, i32
  }
  func.func @transform_4(%arg0: i32) -> (i32, i32) {
    %c0_i32 = arith.constant 0 : i32
    %c0_i32_0 = arith.constant 0 : i32
    %c0_i32_1 = arith.constant 0 : i32
    return %c0_i32, %c0_i32_0 : i32, i32
  }
  func.func @transform_5(%arg0: i32) -> (i32, i32) {
    %c0_i32 = arith.constant 0 : i32
    %c0_i32_0 = arith.constant 0 : i32
    %c0_i32_1 = arith.constant 0 : i32
    return %c0_i32, %c0_i32_0 : i32, i32
  }
  func.func @transform_6(%arg0: i32) -> (i32, i32) {
    %c0_i32 = arith.constant 0 : i32
    %c0_i32_0 = arith.constant 0 : i32
    %c0_i32_1 = arith.constant 0 : i32
    return %c0_i32, %c0_i32_0 : i32, i32
  }
  func.func @transform_7(%arg0: i32) -> (i32, i32) {
    %c0_i32 = arith.constant 0 : i32
    %c0_i32_0 = arith.constant 0 : i32
    %c0_i32_1 = arith.constant 0 : i32
    return %c0_i32, %c0_i32_0 : i32, i32
  }
  func.func @transform_8(%arg0: i32) -> (i32, i32) {
    %c0_i32 = arith.constant 0 : i32
    %c0_i32_0 = arith.constant 0 : i32
    %c0_i32_1 = arith.constant 0 : i32
    return %c0_i32, %c0_i32_0 : i32, i32
  }
  func.func @transform_9(%arg0: i32) -> (i32, i32) {
    %c0_i32 = arith.constant 0 : i32
    %c0_i32_0 = arith.constant 0 : i32
    return %arg0, %c0_i32 : i32, i32
  }
}

module attributes {stable_mosaic.version = 11 : i64} {
  func.func @_deepnet_fused_kernel(%arg0: i32, %arg1: memref<8x128xf32, #tpu.memory_space<vmem>>, %arg2: memref<128x128xbf16, #tpu.memory_space<vmem>>, %arg3: memref<1x128xf32, #tpu.memory_space<vmem>>, %arg4: memref<128x128xbf16, #tpu.memory_space<vmem>>, %arg5: memref<1x128xf32, #tpu.memory_space<vmem>>, %arg6: memref<128x128xbf16, #tpu.memory_space<vmem>>, %arg7: memref<1x128xf32, #tpu.memory_space<vmem>>, %arg8: memref<128x128xbf16, #tpu.memory_space<vmem>>, %arg9: memref<1x128xf32, #tpu.memory_space<vmem>>, %arg10: memref<8x128xf32, #tpu.memory_space<vmem>>) attributes {dimension_semantics = [#tpu.dimension_semantics<parallel>], iteration_bounds = array<i64: 1>, scalar_prefetch = 0 : i64, scratch_operands = 0 : i64, tpu.core_type = #tpu.core_type<tc>, window_params = [{transform_indices = @transform_0, window_bounds = array<i64: 8, 128>}, {pipeline_mode = #tpu.pipeline_mode<synchronous>, transform_indices = @transform_1, window_bounds = array<i64: 128, 128>}, {pipeline_mode = #tpu.pipeline_mode<synchronous>, transform_indices = @transform_2, window_bounds = array<i64: 1, 128>}, {pipeline_mode = #tpu.pipeline_mode<synchronous>, transform_indices = @transform_3, window_bounds = array<i64: 128, 128>}, {pipeline_mode = #tpu.pipeline_mode<synchronous>, transform_indices = @transform_4, window_bounds = array<i64: 1, 128>}, {pipeline_mode = #tpu.pipeline_mode<synchronous>, transform_indices = @transform_5, window_bounds = array<i64: 128, 128>}, {pipeline_mode = #tpu.pipeline_mode<synchronous>, transform_indices = @transform_6, window_bounds = array<i64: 1, 128>}, {pipeline_mode = #tpu.pipeline_mode<synchronous>, transform_indices = @transform_7, window_bounds = array<i64: 128, 128>}, {pipeline_mode = #tpu.pipeline_mode<synchronous>, transform_indices = @transform_8, window_bounds = array<i64: 1, 128>}, {transform_indices = @transform_9, window_bounds = array<i64: 8, 128>}]} {
    %c0 = arith.constant 0 : index
    %c0_0 = arith.constant 0 : index
    %0 = vector.load %arg1[%c0, %c0_0] : memref<8x128xf32, #tpu.memory_space<vmem>>, vector<8x128xf32>
    %1 = arith.truncf %0 : vector<8x128xf32> to vector<8x128xbf16>
    %c0_1 = arith.constant 0 : index
    %c0_2 = arith.constant 0 : index
    %2 = vector.load %arg2[%c0_1, %c0_2] : memref<128x128xbf16, #tpu.memory_space<vmem>>, vector<128x128xbf16>
    %cst = arith.constant dense<0.000000e+00> : vector<8x128xf32>
    %3 = tpu.matmul %1, %2, %cst {dimension_numbers = #tpu.dot_dimension_numbers<[1], [0], [0], [1], [0, 0, 1, 1], [], []>} : vector<8x128xbf16>, vector<128x128xbf16>, vector<8x128xf32> -> vector<8x128xf32>
    %c0_3 = arith.constant 0 : index
    %c0_4 = arith.constant 0 : index
    %4 = vector.load %arg3[%c0_3, %c0_4] : memref<1x128xf32, #tpu.memory_space<vmem>>, vector<1x128xf32>
    %5 = vector.broadcast %4 : vector<1x128xf32> to vector<8x128xf32>
    %6 = arith.addf %3, %5 : vector<8x128xf32>
    %cst_5 = arith.constant 5.000000e-01 : f32
    %7 = vector.broadcast %cst_5 : f32 to vector<8x128xf32>
    %8 = arith.mulf %7, %6 : vector<8x128xf32>
    %9 = math.tanh %8 : vector<8x128xf32>
    %cst_6 = arith.constant 5.000000e-01 : f32
    %10 = vector.broadcast %cst_6 : f32 to vector<8x128xf32>
    %11 = arith.mulf %10, %9 : vector<8x128xf32>
    %cst_7 = arith.constant 5.000000e-01 : f32
    %12 = vector.broadcast %cst_7 : f32 to vector<8x128xf32>
    %13 = arith.addf %11, %12 : vector<8x128xf32>
    %14 = arith.truncf %13 : vector<8x128xf32> to vector<8x128xbf16>
    %c0_8 = arith.constant 0 : index
    %c0_9 = arith.constant 0 : index
    %15 = vector.load %arg4[%c0_8, %c0_9] : memref<128x128xbf16, #tpu.memory_space<vmem>>, vector<128x128xbf16>
    %cst_10 = arith.constant dense<0.000000e+00> : vector<8x128xf32>
    %16 = tpu.matmul %14, %15, %cst_10 {dimension_numbers = #tpu.dot_dimension_numbers<[1], [0], [0], [1], [0, 0, 1, 1], [], []>} : vector<8x128xbf16>, vector<128x128xbf16>, vector<8x128xf32> -> vector<8x128xf32>
    %c0_11 = arith.constant 0 : index
    %c0_12 = arith.constant 0 : index
    %17 = vector.load %arg5[%c0_11, %c0_12] : memref<1x128xf32, #tpu.memory_space<vmem>>, vector<1x128xf32>
    %18 = vector.broadcast %17 : vector<1x128xf32> to vector<8x128xf32>
    %19 = arith.addf %16, %18 : vector<8x128xf32>
    %cst_13 = arith.constant 5.000000e-01 : f32
    %20 = vector.broadcast %cst_13 : f32 to vector<8x128xf32>
    %21 = arith.mulf %20, %19 : vector<8x128xf32>
    %22 = math.tanh %21 : vector<8x128xf32>
    %cst_14 = arith.constant 5.000000e-01 : f32
    %23 = vector.broadcast %cst_14 : f32 to vector<8x128xf32>
    %24 = arith.mulf %23, %22 : vector<8x128xf32>
    %cst_15 = arith.constant 5.000000e-01 : f32
    %25 = vector.broadcast %cst_15 : f32 to vector<8x128xf32>
    %26 = arith.addf %24, %25 : vector<8x128xf32>
    %27 = arith.truncf %26 : vector<8x128xf32> to vector<8x128xbf16>
    %c0_16 = arith.constant 0 : index
    %c0_17 = arith.constant 0 : index
    %28 = vector.load %arg6[%c0_16, %c0_17] : memref<128x128xbf16, #tpu.memory_space<vmem>>, vector<128x128xbf16>
    %cst_18 = arith.constant dense<0.000000e+00> : vector<8x128xf32>
    %29 = tpu.matmul %27, %28, %cst_18 {dimension_numbers = #tpu.dot_dimension_numbers<[1], [0], [0], [1], [0, 0, 1, 1], [], []>} : vector<8x128xbf16>, vector<128x128xbf16>, vector<8x128xf32> -> vector<8x128xf32>
    %c0_19 = arith.constant 0 : index
    %c0_20 = arith.constant 0 : index
    %30 = vector.load %arg7[%c0_19, %c0_20] : memref<1x128xf32, #tpu.memory_space<vmem>>, vector<1x128xf32>
    %31 = vector.broadcast %30 : vector<1x128xf32> to vector<8x128xf32>
    %32 = arith.addf %29, %31 : vector<8x128xf32>
    %cst_21 = arith.constant 5.000000e-01 : f32
    %33 = vector.broadcast %cst_21 : f32 to vector<8x128xf32>
    %34 = arith.mulf %33, %32 : vector<8x128xf32>
    %35 = math.tanh %34 : vector<8x128xf32>
    %cst_22 = arith.constant 5.000000e-01 : f32
    %36 = vector.broadcast %cst_22 : f32 to vector<8x128xf32>
    %37 = arith.mulf %36, %35 : vector<8x128xf32>
    %cst_23 = arith.constant 5.000000e-01 : f32
    %38 = vector.broadcast %cst_23 : f32 to vector<8x128xf32>
    %39 = arith.addf %37, %38 : vector<8x128xf32>
    %40 = arith.truncf %39 : vector<8x128xf32> to vector<8x128xbf16>
    %c0_24 = arith.constant 0 : index
    %c0_25 = arith.constant 0 : index
    %41 = vector.load %arg8[%c0_24, %c0_25] : memref<128x128xbf16, #tpu.memory_space<vmem>>, vector<128x128xbf16>
    %cst_26 = arith.constant dense<0.000000e+00> : vector<8x128xf32>
    %42 = tpu.matmul %40, %41, %cst_26 {dimension_numbers = #tpu.dot_dimension_numbers<[1], [0], [0], [1], [0, 0, 1, 1], [], []>} : vector<8x128xbf16>, vector<128x128xbf16>, vector<8x128xf32> -> vector<8x128xf32>
    %c0_27 = arith.constant 0 : index
    %c0_28 = arith.constant 0 : index
    %43 = vector.load %arg9[%c0_27, %c0_28] : memref<1x128xf32, #tpu.memory_space<vmem>>, vector<1x128xf32>
    %44 = vector.broadcast %43 : vector<1x128xf32> to vector<8x128xf32>
    %45 = arith.addf %42, %44 : vector<8x128xf32>
    %c0_29 = arith.constant 0 : index
    %c0_30 = arith.constant 0 : index
    %46 = vector.load %arg10[%c0_29, %c0_30] : memref<8x128xf32, #tpu.memory_space<vmem>>, vector<8x128xf32>
    tpu.vector_store %arg10[%c0_29, %c0_30], %45 {strides = array<i32>} : memref<8x128xf32, #tpu.memory_space<vmem>>, vector<8x128xf32>,
    return
  }
  func.func @transform_0(%arg0: i32) -> (i32, i32) {
    %c0_i32 = arith.constant 0 : i32
    %c0_i32_0 = arith.constant 0 : i32
    return %arg0, %c0_i32 : i32, i32
  }
  func.func @transform_1(%arg0: i32) -> (i32, i32) {
    %c0_i32 = arith.constant 0 : i32
    %c0_i32_0 = arith.constant 0 : i32
    %c0_i32_1 = arith.constant 0 : i32
    return %c0_i32, %c0_i32_0 : i32, i32
  }
  func.func @transform_2(%arg0: i32) -> (i32, i32) {
    %c0_i32 = arith.constant 0 : i32
    %c0_i32_0 = arith.constant 0 : i32
    %c0_i32_1 = arith.constant 0 : i32
    return %c0_i32, %c0_i32_0 : i32, i32
  }
  func.func @transform_3(%arg0: i32) -> (i32, i32) {
    %c0_i32 = arith.constant 0 : i32
    %c0_i32_0 = arith.constant 0 : i32
    %c0_i32_1 = arith.constant 0 : i32
    return %c0_i32, %c0_i32_0 : i32, i32
  }
  func.func @transform_4(%arg0: i32) -> (i32, i32) {
    %c0_i32 = arith.constant 0 : i32
    %c0_i32_0 = arith.constant 0 : i32
    %c0_i32_1 = arith.constant 0 : i32
    return %c0_i32, %c0_i32_0 : i32, i32
  }
  func.func @transform_5(%arg0: i32) -> (i32, i32) {
    %c0_i32 = arith.constant 0 : i32
    %c0_i32_0 = arith.constant 0 : i32
    %c0_i32_1 = arith.constant 0 : i32
    return %c0_i32, %c0_i32_0 : i32, i32
  }
  func.func @transform_6(%arg0: i32) -> (i32, i32) {
    %c0_i32 = arith.constant 0 : i32
    %c0_i32_0 = arith.constant 0 : i32
    %c0_i32_1 = arith.constant 0 : i32
    return %c0_i32, %c0_i32_0 : i32, i32
  }
  func.func @transform_7(%arg0: i32) -> (i32, i32) {
    %c0_i32 = arith.constant 0 : i32
    %c0_i32_0 = arith.constant 0 : i32
    %c0_i32_1 = arith.constant 0 : i32
    return %c0_i32, %c0_i32_0 : i32, i32
  }
  func.func @transform_8(%arg0: i32) -> (i32, i32) {
    %c0_i32 = arith.constant 0 : i32
    %c0_i32_0 = arith.constant 0 : i32
    %c0_i32_1 = arith.constant 0 : i32
    return %c0_i32, %c0_i32_0 : i32, i32
  }
  func.func @transform_9(%arg0: i32) -> (i32, i32) {
    %c0_i32 = arith.constant 0 : i32
    %c0_i32_0 = arith.constant 0 : i32
    return %arg0, %c0_i32 : i32, i32
  }
}

</mosaic_0001>

<llo_original>
// kernel: tpu_custom_call.1
$region0: #{tpu_custom_call.1}
  #allocation0 [shape = 'u32[]', space=smem, size = 0x4, offset = 0x4, fixed_abs, tag = 'smem constant byte address 0x4 - core index']
  #allocation1 [shape = 'u32[144,128]{1,0:T(1,128)}', space=vmem, size = 0x12000, scoped, tag = 'internal scratch']
  %s0 = inlined_call_operand.hbm [shape: f32[8,128], index: 0, kind: input, shape index: {}]
  %s1 = inlined_call_operand.hbm [shape: bf16[128,128], index: 1, kind: input, shape index: {}]
  %s2 = inlined_call_operand.vmem [shape: f32[1,128], index: 2, kind: input, shape index: {}]
  %s3 = inlined_call_operand.hbm [shape: bf16[128,128], index: 3, kind: input, shape index: {}]
  %s4 = inlined_call_operand.vmem [shape: f32[1,128], index: 4, kind: input, shape index: {}]
  %s5 = inlined_call_operand.hbm [shape: bf16[128,128], index: 5, kind: input, shape index: {}]
  %s6 = inlined_call_operand.vmem [shape: f32[1,128], index: 6, kind: input, shape index: {}]
  %s7 = inlined_call_operand.hbm [shape: bf16[128,128], index: 7, kind: input, shape index: {}]
  %s8 = inlined_call_operand.vmem [shape: f32[1,128], index: 8, kind: input, shape index: {}]
  %s9 = inlined_call_operand.hbm [shape: f32[8,128], index: 9, kind: output, shape index: {}]
  %s10 = sld [smem:[#allocation0]]
  $region66: #{tpu_custom_call.1} parent=0
    _
  %s12 = ssub.s32 1, %s10
  %s13 = scalar_select 0, %s12, %s10
  $region1: #{tpu_custom_call.1} parent=0
    #allocation2 [shape = 'u8[4096]{0}', space=vmem, size = 0x1000, scoped, tag = 'input window, operand 0, single buffered']
    #allocation3 [shape = 's32[1]{0}', space=sflag, size = 0x4, scoped, tag = 'scoped memory for tpu_custom_call.1']
    #allocation4 [shape = 's32[1]{0}', space=sflag, size = 0x4, scoped, tag = 'scoped memory for tpu_custom_call.1']
    #allocation5 [shape = 'u8[32768]{0}', space=vmem, size = 0x8000, scoped, tag = 'input window, operand 1, single buffered']
    #allocation6 [shape = 's32[1]{0}', space=sflag, size = 0x4, scoped, tag = 'scoped memory for tpu_custom_call.1']
    #allocation7 [shape = 'u8[32768]{0}', space=vmem, size = 0x8000, scoped, tag = 'input window, operand 3, single buffered']
    #allocation8 [shape = 'u8[32768]{0}', space=vmem, size = 0x8000, scoped, tag = 'input window, operand 5, single buffered']
    #allocation9 [shape = 's32[1]{0}', space=sflag, size = 0x4, scoped, tag = 'scoped memory for tpu_custom_call.1']
    #allocation10 [shape = 'u8[32768]{0}', space=vmem, size = 0x8000, scoped, tag = 'input window, operand 7, single buffered']
    #allocation11 [shape = 'u8[4096]{0}', space=vmem, size = 0x1000, scoped, tag = 'output window, operand 0, single buffered']
    %14 = vsyncpa [#allocation3], 0
    %15 = vsyncpa [#allocation6], 0
    %16 = vsyncpa [#allocation9], 0
    %17 = vsyncpa [#allocation4], 0
    // Predicated region
    $region2: #{tpu_custom_call.1} parent=1 // pred_check
      _
    $region3: #{tpu_custom_call.1} parent=1 // pred_check_branch
      %19 = sbr.rel (0) target = $region5
    $region4: #{tpu_custom_call.1} parent=1 // pred_region
      %s21 = ssub.s32 128, 128
      %22 = vsyncadd [#allocation3], %s21
      %s24 = sshll.u32 [#allocation2], 4
      %s25 = int_to_ptr.vmem [resolvable:$true] %s24
      %27 = dma.hbm_to_vmem [thread:$0]  %s0, 128, %s25, [#allocation3]
    $region5: #{tpu_custom_call.1} parent=1 // pred_fallthru
      _
    // Predicated region
    $region6: #{tpu_custom_call.1} parent=1 // pred_check
      _
    $region7: #{tpu_custom_call.1} parent=1 // pred_check_branch
      %29 = sbr.rel (0) target = $region9
    $region8: #{tpu_custom_call.1} parent=1 // pred_region
      %s31 = ssub.s32 1024, 1024
      %32 = vsyncadd [#allocation6], %s31
      %s33 = sshll.u32 [#allocation5], 4
      %s34 = int_to_ptr.vmem [resolvable:$true] %s33
      %39 = dma.hbm_to_vmem [thread:$0]  %s1, 1024, %s34, [#allocation6], 64, 64, 4
    $region9: #{tpu_custom_call.1} parent=1 // pred_fallthru
      _
    // Predicated region
    $region10: #{tpu_custom_call.1} parent=1 // pred_check
      _
    $region11: #{tpu_custom_call.1} parent=1 // pred_check_branch
      %41 = sbr.rel (0) target = $region13
    $region12: #{tpu_custom_call.1} parent=1 // pred_region
      _
    $region13: #{tpu_custom_call.1} parent=1 // pred_fallthru
      _
    // Predicated region
    $region14: #{tpu_custom_call.1} parent=1 // pred_check
      _
    $region15: #{tpu_custom_call.1} parent=1 // pred_check_branch
      %43 = sbr.rel (0) target = $region17
    $region16: #{tpu_custom_call.1} parent=1 // pred_region
      %s45 = ssub.s32 1024, 1024
      %46 = vsyncadd [#allocation6], %s45
      %s47 = sshll.u32 [#allocation7], 4
      %s48 = int_to_ptr.vmem [resolvable:$true] %s47
      %53 = dma.hbm_to_vmem [thread:$0]  %s3, 1024, %s48, [#allocation6], 64, 64, 4
    $region17: #{tpu_custom_call.1} parent=1 // pred_fallthru
      _
    // Predicated region
    $region18: #{tpu_custom_call.1} parent=1 // pred_check
      _
    $region19: #{tpu_custom_call.1} parent=1 // pred_check_branch
      %55 = sbr.rel (0) target = $region21
    $region20: #{tpu_custom_call.1} parent=1 // pred_region
      _
    $region21: #{tpu_custom_call.1} parent=1 // pred_fallthru
      _
    // Predicated region
    $region22: #{tpu_custom_call.1} parent=1 // pred_check
      _
    $region23: #{tpu_custom_call.1} parent=1 // pred_check_branch
      %57 = sbr.rel (0) target = $region25
    $region24: #{tpu_custom_call.1} parent=1 // pred_region
      %s59 = ssub.s32 1024, 1024
      %60 = vsyncadd [#allocation9], %s59
      %s61 = sshll.u32 [#allocation8], 4
      %s62 = int_to_ptr.vmem [resolvable:$true] %s61
      %67 = dma.hbm_to_vmem [thread:$0]  %s5, 1024, %s62, [#allocation9], 64, 64, 4
    $region25: #{tpu_custom_call.1} parent=1 // pred_fallthru
      _
    // Predicated region
    $region26: #{tpu_custom_call.1} parent=1 // pred_check
      _
    $region27: #{tpu_custom_call.1} parent=1 // pred_check_branch
      %69 = sbr.rel (0) target = $region29
    $region28: #{tpu_custom_call.1} parent=1 // pred_region
      _
    $region29: #{tpu_custom_call.1} parent=1 // pred_fallthru
      _
    // Predicated region
    $region30: #{tpu_custom_call.1} parent=1 // pred_check
      _
    $region31: #{tpu_custom_call.1} parent=1 // pred_check_branch
      %71 = sbr.rel (0) target = $region33
    $region32: #{tpu_custom_call.1} parent=1 // pred_region
      %s73 = ssub.s32 1024, 1024
      %74 = vsyncadd [#allocation9], %s73
      %s75 = sshll.u32 [#allocation10], 4
      %s76 = int_to_ptr.vmem [resolvable:$true] %s75
      %81 = dma.hbm_to_vmem [thread:$0]  %s7, 1024, %s76, [#allocation9], 64, 64, 4
    $region33: #{tpu_custom_call.1} parent=1 // pred_fallthru
      _
    // Predicated region
    $region34: #{tpu_custom_call.1} parent=1 // pred_check
      _
    $region35: #{tpu_custom_call.1} parent=1 // pred_check_branch
      %83 = sbr.rel (0) target = $region37
    $region36: #{tpu_custom_call.1} parent=1 // pred_region
      _
    $region37: #{tpu_custom_call.1} parent=1 // pred_fallthru
      _
    // Predicated region
    $region38: #{tpu_custom_call.1} parent=1 // pred_check
      _
    $region39: #{tpu_custom_call.1} parent=1 // pred_check_branch
      %85 = sbr.rel (0) target = $region41
    $region40: #{tpu_custom_call.1} parent=1 // pred_region
      %86 = dma.done [#allocation3], 128
    $region41: #{tpu_custom_call.1} parent=1 // pred_fallthru
      _
    // Predicated region
    $region42: #{tpu_custom_call.1} parent=1 // pred_check
      _
    $region43: #{tpu_custom_call.1} parent=1 // pred_check_branch
      %88 = sbr.rel (0) target = $region45
    $region44: #{tpu_custom_call.1} parent=1 // pred_region
      %89 = dma.done [#allocation6], 1024
    $region45: #{tpu_custom_call.1} parent=1 // pred_fallthru
      _
    // Predicated region
    $region46: #{tpu_custom_call.1} parent=1 // pred_check
      _
    $region47: #{tpu_custom_call.1} parent=1 // pred_check_branch
      %91 = sbr.rel (0) target = $region49
    $region48: #{tpu_custom_call.1} parent=1 // pred_region
      %92 = dma.done [#allocation6], 1024
    $region49: #{tpu_custom_call.1} parent=1 // pred_fallthru
      _
    // Predicated region
    $region50: #{tpu_custom_call.1} parent=1 // pred_check
      _
    $region51: #{tpu_custom_call.1} parent=1 // pred_check_branch
      %94 = sbr.rel (0) target = $region53
    $region52: #{tpu_custom_call.1} parent=1 // pred_region
      %95 = dma.done [#allocation9], 1024
    $region53: #{tpu_custom_call.1} parent=1 // pred_fallthru
      _
    // Predicated region
    $region54: #{tpu_custom_call.1} parent=1 // pred_check
      _
    $region55: #{tpu_custom_call.1} parent=1 // pred_check_branch
      %97 = sbr.rel (0) target = $region57
    $region56: #{tpu_custom_call.1} parent=1 // pred_region
      %98 = dma.done [#allocation9], 1024
    $region57: #{tpu_custom_call.1} parent=1 // pred_fallthru
      _
    %v100 = vld [vmem:[#allocation2] sm:$0xff]
    %v101 = vpack.c.bf16 %v100, %v100
    %v102 = vld [vmem:[#allocation5] sm:$0xf]
    %v103 = vld [vmem:[#allocation5 + $0x4] sm:$0xf]
    %v104 = vld [vmem:[#allocation5 + $0x8] sm:$0xf]
    %v105 = vld [vmem:[#allocation5 + $0xc] sm:$0xf]
    %v106 = vld [vmem:[#allocation5 + $0x10] sm:$0xf]
    %v107 = vld [vmem:[#allocation5 + $0x14] sm:$0xf]
    %v108 = vld [vmem:[#allocation5 + $0x18] sm:$0xf]
    %v109 = vld [vmem:[#allocation5 + $0x1c] sm:$0xf]
    %v110 = vld [vmem:[#allocation5 + $0x20] sm:$0xf]
    %v111 = vld [vmem:[#allocation5 + $0x24] sm:$0xf]
    %v112 = vld [vmem:[#allocation5 + $0x28] sm:$0xf]
    %v113 = vld [vmem:[#allocation5 + $0x2c] sm:$0xf]
    %v114 = vld [vmem:[#allocation5 + $0x30] sm:$0xf]
    %v115 = vld [vmem:[#allocation5 + $0x34] sm:$0xf]
    %v116 = vld [vmem:[#allocation5 + $0x38] sm:$0xf]
    %v117 = vld [vmem:[#allocation5 + $0x3c] sm:$0xf]
    %v118 = vld [vmem:[%s2] sm:$0x1]
    %v120 = vlaneseq
    %v121 = vshrl.u32 %v120, 7
    %v122 = vsub.s32 0, %v121
    %v123 = vrot.slane %v118, %v122
    %v141 = vunpack.c.l.b16 %v102
    %v142 = vunpack.c.l.b16 %v103
    %v143 = vunpack.c.l.b16 %v104
    %v144 = vunpack.c.l.b16 %v105
    %v145 = vunpack.c.l.b16 %v106
    %v146 = vunpack.c.l.b16 %v107
    %v147 = vunpack.c.l.b16 %v108
    %v148 = vunpack.c.l.b16 %v109
    %v149 = vunpack.c.l.b16 %v110
    %v150 = vunpack.c.l.b16 %v111
    %v151 = vunpack.c.l.b16 %v112
    %v152 = vunpack.c.l.b16 %v113
    %v153 = vunpack.c.l.b16 %v114
    %v154 = vunpack.c.l.b16 %v115
    %v155 = vunpack.c.l.b16 %v116
    %v156 = vunpack.c.l.b16 %v117
    %v157 = vpack.c.b16 %v142, %v141
    %v158 = vpack.c.b16 %v144, %v143
    %v159 = vpack.c.b16 %v146, %v145
    %v160 = vpack.c.b16 %v148, %v147
    %v161 = vpack.c.b16 %v150, %v149
    %v162 = vpack.c.b16 %v152, %v151
    %v163 = vpack.c.b16 %v154, %v153
    %v164 = vpack.c.b16 %v156, %v155
    %173 = vmatprep.subr.bf16.mxu0 0
    %174 = vmatpush1.bf16.msra.mxu0 %v157
    %175 = vmatprep.subr.bf16.mxu0 0
    %176 = vmatpush1.bf16.msra.mxu0 %v158
    %177 = vmatprep.subr.bf16.mxu0 0
    %178 = vmatpush1.bf16.msra.mxu0 %v159
    %179 = vmatprep.subr.bf16.mxu0 0
    %180 = vmatpush1.bf16.msra.mxu0 %v160
    %181 = vmatprep.subr.bf16.mxu0 0
    %182 = vmatpush1.bf16.msra.mxu0 %v161
    %183 = vmatprep.subr.bf16.mxu0 0
    %184 = vmatpush1.bf16.msra.mxu0 %v162
    %185 = vmatprep.subr.bf16.mxu0 0
    %186 = vmatpush1.bf16.msra.mxu0 %v163
    %187 = vmatprep.subr.bf16.mxu0 0
    %188 = vmatpush1.bf16.msra.mxu0 %v164
    %189 = vmatprep.subr.bf16.mxu0 0
    %190 = vmatpush1.bf16.msra.mxu0 0
    %191 = vmatprep.subr.bf16.mxu0 0
    %192 = vmatpush1.bf16.msra.mxu0 0
    %193 = vmatprep.subr.bf16.mxu0 0
    %194 = vmatpush1.bf16.msra.mxu0 0
    %195 = vmatprep.subr.bf16.mxu0 0
    %196 = vmatpush1.bf16.msra.mxu0 0
    %197 = vmatprep.subr.bf16.mxu0 0
    %198 = vmatpush1.bf16.msra.mxu0 0
    %199 = vmatprep.subr.bf16.mxu0 0
    %200 = vmatpush1.bf16.msra.mxu0 0
    %201 = vmatprep.subr.bf16.mxu0 0
    %202 = vmatpush1.bf16.msra.mxu0 0
    %203 = vmatprep.subr.bf16.mxu0 0
    %204 = vmatpush1.bf16.msra.mxu0 0
    %205 = vmatprep.mubr.bf16.mxu0 0
    %206 = vmatmul.mubr.bf16.gmra.mrb[0].mxu0 %v101
    %v207 = vpop.f32.mrb[0].mxu0
    %v208 = vadd.f32 %v123, %v207
    %v209 = vpop.f32.mrb[0].mxu0
    %v210 = vpop.f32.mrb[0].mxu0
    %v211 = vpop.f32.mrb[0].mxu0
    %212 = vdwg.mxu0
    %v213 = vmul.f32 %v208, 0.5
    %v214 = vtanh.pop %v213
    %v215 = vmul.f32 %v214, 0.5
    %v216 = vadd.f32 %v215, 0.5
    %v217 = vpack.c.bf16 %v216, %v216
    %v218 = vld [vmem:[#allocation7] sm:$0xf]
    %v219 = vld [vmem:[#allocation7 + $0x4] sm:$0xf]
    %v220 = vld [vmem:[#allocation7 + $0x8] sm:$0xf]
    %v221 = vld [vmem:[#allocation7 + $0xc] sm:$0xf]
    %v222 = vld [vmem:[#allocation7 + $0x10] sm:$0xf]
    %v223 = vld [vmem:[#allocation7 + $0x14] sm:$0xf]
    %v224 = vld [vmem:[#allocation7 + $0x18] sm:$0xf]
    %v225 = vld [vmem:[#allocation7 + $0x1c] sm:$0xf]
    %v226 = vld [vmem:[#allocation7 + $0x20] sm:$0xf]
    %v227 = vld [vmem:[#allocation7 + $0x24] sm:$0xf]
    %v228 = vld [vmem:[#allocation7 + $0x28] sm:$0xf]
    %v229 = vld [vmem:[#allocation7 + $0x2c] sm:$0xf]
    %v230 = vld [vmem:[#allocation7 + $0x30] sm:$0xf]
    %v231 = vld [vmem:[#allocation7 + $0x34] sm:$0xf]
    %v232 = vld [vmem:[#allocation7 + $0x38] sm:$0xf]
    %v233 = vld [vmem:[#allocation7 + $0x3c] sm:$0xf]
    %v234 = vld [vmem:[%s4] sm:$0x1]
    %v236 = vlaneseq
    %v237 = vshrl.u32 %v236, 7
    %v238 = vsub.s32 0, %v237
    %v239 = vrot.slane %v234, %v238
    %v257 = vunpack.c.l.b16 %v218
    %v258 = vunpack.c.l.b16 %v219
    %v259 = vunpack.c.l.b16 %v220
    %v260 = vunpack.c.l.b16 %v221
    %v261 = vunpack.c.l.b16 %v222
    %v262 = vunpack.c.l.b16 %v223
    %v263 = vunpack.c.l.b16 %v224
    %v264 = vunpack.c.l.b16 %v225
    %v265 = vunpack.c.l.b16 %v226
    %v266 = vunpack.c.l.b16 %v227
    %v267 = vunpack.c.l.b16 %v228
    %v268 = vunpack.c.l.b16 %v229
    %v269 = vunpack.c.l.b16 %v230
    %v270 = vunpack.c.l.b16 %v231
    %v271 = vunpack.c.l.b16 %v232
    %v272 = vunpack.c.l.b16 %v233
    %v273 = vpack.c.b16 %v258, %v257
    %v274 = vpack.c.b16 %v260, %v259
    %v275 = vpack.c.b16 %v262, %v261
    %v276 = vpack.c.b16 %v264, %v263
    %v277 = vpack.c.b16 %v266, %v265
    %v278 = vpack.c.b16 %v268, %v267
    %v279 = vpack.c.b16 %v270, %v269
    %v280 = vpack.c.b16 %v272, %v271
    %289 = vmatprep.subr.bf16.mxu0 0
    %290 = vmatpush1.bf16.msra.mxu0 %v273
    %291 = vmatprep.subr.bf16.mxu0 0
    %292 = vmatpush1.bf16.msra.mxu0 %v274
    %293 = vmatprep.subr.bf16.mxu0 0
    %294 = vmatpush1.bf16.msra.mxu0 %v275
    %295 = vmatprep.subr.bf16.mxu0 0
    %296 = vmatpush1.bf16.msra.mxu0 %v276
    %297 = vmatprep.subr.bf16.mxu0 0
    %298 = vmatpush1.bf16.msra.mxu0 %v277
    %299 = vmatprep.subr.bf16.mxu0 0
    %300 = vmatpush1.bf16.msra.mxu0 %v278
    %301 = vmatprep.subr.bf16.mxu0 0
    %302 = vmatpush1.bf16.msra.mxu0 %v279
    %303 = vmatprep.subr.bf16.mxu0 0
    %304 = vmatpush1.bf16.msra.mxu0 %v280
    %305 = vmatprep.subr.bf16.mxu0 0
    %306 = vmatpush1.bf16.msra.mxu0 0
    %307 = vmatprep.subr.bf16.mxu0 0
    %308 = vmatpush1.bf16.msra.mxu0 0
    %309 = vmatprep.subr.bf16.mxu0 0
    %310 = vmatpush1.bf16.msra.mxu0 0
    %311 = vmatprep.subr.bf16.mxu0 0
    %312 = vmatpush1.bf16.msra.mxu0 0
    %313 = vmatprep.subr.bf16.mxu0 0
    %314 = vmatpush1.bf16.msra.mxu0 0
    %315 = vmatprep.subr.bf16.mxu0 0
    %316 = vmatpush1.bf16.msra.mxu0 0
    %317 = vmatprep.subr.bf16.mxu0 0
    %318 = vmatpush1.bf16.msra.mxu0 0
    %319 = vmatprep.subr.bf16.mxu0 0
    %320 = vmatpush1.bf16.msra.mxu0 0
    %321 = vmatprep.mubr.bf16.mxu0 0
    %322 = vmatmul.mubr.bf16.gmra.mrb[0].mxu0 %v217
    %v323 = vpop.f32.mrb[0].mxu0
    %v324 = vadd.f32 %v239, %v323
    %v325 = vpop.f32.mrb[0].mxu0
    %v326 = vpop.f32.mrb[0].mxu0
    %v327 = vpop.f32.mrb[0].mxu0
    %328 = vdwg.mxu0
    %v329 = vmul.f32 %v324, 0.5
    %v330 = vtanh.pop %v329
    %v331 = vmul.f32 %v330, 0.5
    %v332 = vadd.f32 %v331, 0.5
    %v333 = vpack.c.bf16 %v332, %v332
    %v334 = vld [vmem:[#allocation8] sm:$0xf]
    %v335 = vld [vmem:[#allocation8 + $0x4] sm:$0xf]
    %v336 = vld [vmem:[#allocation8 + $0x8] sm:$0xf]
    %v337 = vld [vmem:[#allocation8 + $0xc] sm:$0xf]
    %v338 = vld [vmem:[#allocation8 + $0x10] sm:$0xf]
    %v339 = vld [vmem:[#allocation8 + $0x14] sm:$0xf]
    %v340 = vld [vmem:[#allocation8 + $0x18] sm:$0xf]
    %v341 = vld [vmem:[#allocation8 + $0x1c] sm:$0xf]
    %v342 = vld [vmem:[#allocation8 + $0x20] sm:$0xf]
    %v343 = vld [vmem:[#allocation8 + $0x24] sm:$0xf]
    %v344 = vld [vmem:[#allocation8 + $0x28] sm:$0xf]
    %v345 = vld [vmem:[#allocation8 + $0x2c] sm:$0xf]
    %v346 = vld [vmem:[#allocation8 + $0x30] sm:$0xf]
    %v347 = vld [vmem:[#allocation8 + $0x34] sm:$0xf]
    %v348 = vld [vmem:[#allocation8 + $0x38] sm:$0xf]
    %v349 = vld [vmem:[#allocation8 + $0x3c] sm:$0xf]
    %v350 = vld [vmem:[%s6] sm:$0x1]
    %v352 = vlaneseq
    %v353 = vshrl.u32 %v352, 7
    %v354 = vsub.s32 0, %v353
    %v355 = vrot.slane %v350, %v354
    %v373 = vunpack.c.l.b16 %v334
    %v374 = vunpack.c.l.b16 %v335
    %v375 = vunpack.c.l.b16 %v336
    %v376 = vunpack.c.l.b16 %v337
    %v377 = vunpack.c.l.b16 %v338
    %v378 = vunpack.c.l.b16 %v339
    %v379 = vunpack.c.l.b16 %v340
    %v380 = vunpack.c.l.b16 %v341
    %v381 = vunpack.c.l.b16 %v342
    %v382 = vunpack.c.l.b16 %v343
    %v383 = vunpack.c.l.b16 %v344
    %v384 = vunpack.c.l.b16 %v345
    %v385 = vunpack.c.l.b16 %v346
    %v386 = vunpack.c.l.b16 %v347
    %v387 = vunpack.c.l.b16 %v348
    %v388 = vunpack.c.l.b16 %v349
    %v389 = vpack.c.b16 %v374, %v373
    %v390 = vpack.c.b16 %v376, %v375
    %v391 = vpack.c.b16 %v378, %v377
    %v392 = vpack.c.b16 %v380, %v379
    %v393 = vpack.c.b16 %v382, %v381
    %v394 = vpack.c.b16 %v384, %v383
    %v395 = vpack.c.b16 %v386, %v385
    %v396 = vpack.c.b16 %v388, %v387
    %405 = vmatprep.subr.bf16.mxu0 0
    %406 = vmatpush1.bf16.msra.mxu0 %v389
    %407 = vmatprep.subr.bf16.mxu0 0
    %408 = vmatpush1.bf16.msra.mxu0 %v390
    %409 = vmatprep.subr.bf16.mxu0 0
    %410 = vmatpush1.bf16.msra.mxu0 %v391
    %411 = vmatprep.subr.bf16.mxu0 0
    %412 = vmatpush1.bf16.msra.mxu0 %v392
    %413 = vmatprep.subr.bf16.mxu0 0
    %414 = vmatpush1.bf16.msra.mxu0 %v393
    %415 = vmatprep.subr.bf16.mxu0 0
    %416 = vmatpush1.bf16.msra.mxu0 %v394
    %417 = vmatprep.subr.bf16.mxu0 0
    %418 = vmatpush1.bf16.msra.mxu0 %v395
    %419 = vmatprep.subr.bf16.mxu0 0
    %420 = vmatpush1.bf16.msra.mxu0 %v396
    %421 = vmatprep.subr.bf16.mxu0 0
    %422 = vmatpush1.bf16.msra.mxu0 0
    %423 = vmatprep.subr.bf16.mxu0 0
    %424 = vmatpush1.bf16.msra.mxu0 0
    %425 = vmatprep.subr.bf16.mxu0 0
    %426 = vmatpush1.bf16.msra.mxu0 0
    %427 = vmatprep.subr.bf16.mxu0 0
    %428 = vmatpush1.bf16.msra.mxu0 0
    %429 = vmatprep.subr.bf16.mxu0 0
    %430 = vmatpush1.bf16.msra.mxu0 0
    %431 = vmatprep.subr.bf16.mxu0 0
    %432 = vmatpush1.bf16.msra.mxu0 0
    %433 = vmatprep.subr.bf16.mxu0 0
    %434 = vmatpush1.bf16.msra.mxu0 0
    %435 = vmatprep.subr.bf16.mxu0 0
    %436 = vmatpush1.bf16.msra.mxu0 0
    %437 = vmatprep.mubr.bf16.mxu0 0
    %438 = vmatmul.mubr.bf16.gmra.mrb[0].mxu0 %v333
    %v439 = vpop.f32.mrb[0].mxu0
    %v440 = vadd.f32 %v355, %v439
    %v441 = vpop.f32.mrb[0].mxu0
    %v442 = vpop.f32.mrb[0].mxu0
    %v443 = vpop.f32.mrb[0].mxu0
    %444 = vdwg.mxu0
    %v445 = vmul.f32 %v440, 0.5
    %v446 = vtanh.pop %v445
    %v447 = vmul.f32 %v446, 0.5
    %v448 = vadd.f32 %v447, 0.5
    %v449 = vpack.c.bf16 %v448, %v448
    %v450 = vld [vmem:[#allocation10] sm:$0xf]
    %v451 = vld [vmem:[#allocation10 + $0x4] sm:$0xf]
    %v452 = vld [vmem:[#allocation10 + $0x8] sm:$0xf]
    %v453 = vld [vmem:[#allocation10 + $0xc] sm:$0xf]
    %v454 = vld [vmem:[#allocation10 + $0x10] sm:$0xf]
    %v455 = vld [vmem:[#allocation10 + $0x14] sm:$0xf]
    %v456 = vld [vmem:[#allocation10 + $0x18] sm:$0xf]
    %v457 = vld [vmem:[#allocation10 + $0x1c] sm:$0xf]
    %v458 = vld [vmem:[#allocation10 + $0x20] sm:$0xf]
    %v459 = vld [vmem:[#allocation10 + $0x24] sm:$0xf]
    %v460 = vld [vmem:[#allocation10 + $0x28] sm:$0xf]
    %v461 = vld [vmem:[#allocation10 + $0x2c] sm:$0xf]
    %v462 = vld [vmem:[#allocation10 + $0x30] sm:$0xf]
    %v463 = vld [vmem:[#allocation10 + $0x34] sm:$0xf]
    %v464 = vld [vmem:[#allocation10 + $0x38] sm:$0xf]
    %v465 = vld [vmem:[#allocation10 + $0x3c] sm:$0xf]
    %v466 = vld [vmem:[%s8] sm:$0x1]
    %v468 = vlaneseq
    %v469 = vshrl.u32 %v468, 7
    %v470 = vsub.s32 0, %v469
    %v471 = vrot.slane %v466, %v470
    %v489 = vunpack.c.l.b16 %v450
    %v490 = vunpack.c.l.b16 %v451
    %v491 = vunpack.c.l.b16 %v452
    %v492 = vunpack.c.l.b16 %v453
    %v493 = vunpack.c.l.b16 %v454
    %v494 = vunpack.c.l.b16 %v455
    %v495 = vunpack.c.l.b16 %v456
    %v496 = vunpack.c.l.b16 %v457
    %v497 = vunpack.c.l.b16 %v458
    %v498 = vunpack.c.l.b16 %v459
    %v499 = vunpack.c.l.b16 %v460
    %v500 = vunpack.c.l.b16 %v461
    %v501 = vunpack.c.l.b16 %v462
    %v502 = vunpack.c.l.b16 %v463
    %v503 = vunpack.c.l.b16 %v464
    %v504 = vunpack.c.l.b16 %v465
    %v505 = vpack.c.b16 %v490, %v489
    %v506 = vpack.c.b16 %v492, %v491
    %v507 = vpack.c.b16 %v494, %v493
    %v508 = vpack.c.b16 %v496, %v495
    %v509 = vpack.c.b16 %v498, %v497
    %v510 = vpack.c.b16 %v500, %v499
    %v511 = vpack.c.b16 %v502, %v501
    %v512 = vpack.c.b16 %v504, %v503
    %521 = vmatprep.subr.bf16.mxu0 0
    %522 = vmatpush1.bf16.msra.mxu0 %v505
    %523 = vmatprep.subr.bf16.mxu0 0
    %524 = vmatpush1.bf16.msra.mxu0 %v506
    %525 = vmatprep.subr.bf16.mxu0 0
    %526 = vmatpush1.bf16.msra.mxu0 %v507
    %527 = vmatprep.subr.bf16.mxu0 0
    %528 = vmatpush1.bf16.msra.mxu0 %v508
    %529 = vmatprep.subr.bf16.mxu0 0
    %530 = vmatpush1.bf16.msra.mxu0 %v509
    %531 = vmatprep.subr.bf16.mxu0 0
    %532 = vmatpush1.bf16.msra.mxu0 %v510
    %533 = vmatprep.subr.bf16.mxu0 0
    %534 = vmatpush1.bf16.msra.mxu0 %v511
    %535 = vmatprep.subr.bf16.mxu0 0
    %536 = vmatpush1.bf16.msra.mxu0 %v512
    %537 = vmatprep.subr.bf16.mxu0 0
    %538 = vmatpush1.bf16.msra.mxu0 0
    %539 = vmatprep.subr.bf16.mxu0 0
    %540 = vmatpush1.bf16.msra.mxu0 0
    %541 = vmatprep.subr.bf16.mxu0 0
    %542 = vmatpush1.bf16.msra.mxu0 0
    %543 = vmatprep.subr.bf16.mxu0 0
    %544 = vmatpush1.bf16.msra.mxu0 0
    %545 = vmatprep.subr.bf16.mxu0 0
    %546 = vmatpush1.bf16.msra.mxu0 0
    %547 = vmatprep.subr.bf16.mxu0 0
    %548 = vmatpush1.bf16.msra.mxu0 0
    %549 = vmatprep.subr.bf16.mxu0 0
    %550 = vmatpush1.bf16.msra.mxu0 0
    %551 = vmatprep.subr.bf16.mxu0 0
    %552 = vmatpush1.bf16.msra.mxu0 0
    %553 = vmatprep.mubr.bf16.mxu0 0
    %554 = vmatmul.mubr.bf16.gmra.mrb[0].mxu0 %v449
    %v555 = vpop.f32.mrb[0].mxu0
    %v556 = vadd.f32 %v471, %v555
    %v557 = vpop.f32.mrb[0].mxu0
    %v558 = vpop.f32.mrb[0].mxu0
    %v559 = vpop.f32.mrb[0].mxu0
    %560 = vdwg.mxu0
    %561 = vst [vmem:[#allocation11] sm:$0xff] %v556
    // Predicated region
    $region58: #{tpu_custom_call.1} parent=1 // pred_check
      _
    $region59: #{tpu_custom_call.1} parent=1 // pred_check_branch
      %563 = sbr.rel (0) target = $region61
    $region60: #{tpu_custom_call.1} parent=1 // pred_region
      %s565 = ssub.s32 128, 128
      %566 = vsyncadd [#allocation4], %s565
      %s568 = sshll.u32 [#allocation11], 4
      %s569 = int_to_ptr.vmem [resolvable:$true] %s568
      %571 = dma.vmem_to_hbm [thread:$0]  %s569, 128, %s9, [#allocation4]
    $region61: #{tpu_custom_call.1} parent=1 // pred_fallthru
      _
    // Predicated region
    $region62: #{tpu_custom_call.1} parent=1 // pred_check
      _
    $region63: #{tpu_custom_call.1} parent=1 // pred_check_branch
      %573 = sbr.rel (0) target = $region65
    $region64: #{tpu_custom_call.1} parent=1 // pred_region
      %574 = dma.done [#allocation4], 128
    $region65: #{tpu_custom_call.1} parent=1 // pred_fallthru
      _
    %575 = vsyncpa [#allocation3], 1
    %576 = vsyncpa [#allocation6], 1
    %577 = vsyncpa [#allocation9], 1
    %578 = vsyncpa [#allocation4], 1

// kernel: tpu_custom_call.1
$region0: #{tpu_custom_call.1}
  #allocation0 [shape = 'u32[]', space=smem, size = 0x4, offset = 0x4, fixed_abs, tag = 'smem constant byte address 0x4 - core index']
  #allocation1 [shape = 'u32[144,128]{1,0:T(1,128)}', space=vmem, size = 0x12000, scoped, tag = 'internal scratch']
  %s0 = inlined_call_operand.hbm [shape: f32[8,128], index: 0, kind: input, shape index: {}]
  %s1 = inlined_call_operand.hbm [shape: bf16[128,128], index: 1, kind: input, shape index: {}]
  %s2 = inlined_call_operand.vmem [shape: f32[1,128], index: 2, kind: input, shape index: {}]
  %s3 = inlined_call_operand.hbm [shape: bf16[128,128], index: 3, kind: input, shape index: {}]
  %s4 = inlined_call_operand.vmem [shape: f32[1,128], index: 4, kind: input, shape index: {}]
  %s5 = inlined_call_operand.hbm [shape: bf16[128,128], index: 5, kind: input, shape index: {}]
  %s6 = inlined_call_operand.vmem [shape: f32[1,128], index: 6, kind: input, shape index: {}]
  %s7 = inlined_call_operand.hbm [shape: bf16[128,128], index: 7, kind: input, shape index: {}]
  %s8 = inlined_call_operand.vmem [shape: f32[1,128], index: 8, kind: input, shape index: {}]
  %s9 = inlined_call_operand.hbm [shape: f32[8,128], index: 9, kind: output, shape index: {}]
  %s10 = sld [smem:[#allocation0]]
  $region66: #{tpu_custom_call.1} parent=0
    _
  %s12 = ssub.s32 1, %s10
  %s13 = scalar_select 0, %s12, %s10
  $region1: #{tpu_custom_call.1} parent=0
    #allocation2 [shape = 'u8[4096]{0}', space=vmem, size = 0x1000, scoped, tag = 'input window, operand 0, single buffered']
    #allocation3 [shape = 's32[1]{0}', space=sflag, size = 0x4, scoped, tag = 'scoped memory for tpu_custom_call.1']
    #allocation4 [shape = 's32[1]{0}', space=sflag, size = 0x4, scoped, tag = 'scoped memory for tpu_custom_call.1']
    #allocation5 [shape = 'u8[32768]{0}', space=vmem, size = 0x8000, scoped, tag = 'input window, operand 1, single buffered']
    #allocation6 [shape = 's32[1]{0}', space=sflag, size = 0x4, scoped, tag = 'scoped memory for tpu_custom_call.1']
    #allocation7 [shape = 'u8[32768]{0}', space=vmem, size = 0x8000, scoped, tag = 'input window, operand 3, single buffered']
    #allocation8 [shape = 'u8[32768]{0}', space=vmem, size = 0x8000, scoped, tag = 'input window, operand 5, single buffered']
    #allocation9 [shape = 's32[1]{0}', space=sflag, size = 0x4, scoped, tag = 'scoped memory for tpu_custom_call.1']
    #allocation10 [shape = 'u8[32768]{0}', space=vmem, size = 0x8000, scoped, tag = 'input window, operand 7, single buffered']
    #allocation11 [shape = 'u8[4096]{0}', space=vmem, size = 0x1000, scoped, tag = 'output window, operand 0, single buffered']
    %14 = vsyncpa [#allocation3], 0
    %15 = vsyncpa [#allocation6], 0
    %16 = vsyncpa [#allocation9], 0
    %17 = vsyncpa [#allocation4], 0
    // Predicated region
    $region2: #{tpu_custom_call.1} parent=1 // pred_check
      _
    $region3: #{tpu_custom_call.1} parent=1 // pred_check_branch
      %19 = sbr.rel (0) target = $region5
    $region4: #{tpu_custom_call.1} parent=1 // pred_region
      %s21 = ssub.s32 128, 128
      %22 = vsyncadd [#allocation3], %s21
      %s24 = sshll.u32 [#allocation2], 4
      %s25 = int_to_ptr.vmem [resolvable:$true] %s24
      %27 = dma.hbm_to_vmem [thread:$0]  %s0, 128, %s25, [#allocation3]
    $region5: #{tpu_custom_call.1} parent=1 // pred_fallthru
      _
    // Predicated region
    $region6: #{tpu_custom_call.1} parent=1 // pred_check
      _
    $region7: #{tpu_custom_call.1} parent=1 // pred_check_branch
      %29 = sbr.rel (0) target = $region9
    $region8: #{tpu_custom_call.1} parent=1 // pred_region
      %s31 = ssub.s32 1024, 1024
      %32 = vsyncadd [#allocation6], %s31
      %s33 = sshll.u32 [#allocation5], 4
      %s34 = int_to_ptr.vmem [resolvable:$true] %s33
      %39 = dma.hbm_to_vmem [thread:$0]  %s1, 1024, %s34, [#allocation6], 64, 64, 4
    $region9: #{tpu_custom_call.1} parent=1 // pred_fallthru
      _
    // Predicated region
    $region10: #{tpu_custom_call.1} parent=1 // pred_check
      _
    $region11: #{tpu_custom_call.1} parent=1 // pred_check_branch
      %41 = sbr.rel (0) target = $region13
    $region12: #{tpu_custom_call.1} parent=1 // pred_region
      _
    $region13: #{tpu_custom_call.1} parent=1 // pred_fallthru
      _
    // Predicated region
    $region14: #{tpu_custom_call.1} parent=1 // pred_check
      _
    $region15: #{tpu_custom_call.1} parent=1 // pred_check_branch
      %43 = sbr.rel (0) target = $region17
    $region16: #{tpu_custom_call.1} parent=1 // pred_region
      %s45 = ssub.s32 1024, 1024
      %46 = vsyncadd [#allocation6], %s45
      %s47 = sshll.u32 [#allocation7], 4
      %s48 = int_to_ptr.vmem [resolvable:$true] %s47
      %53 = dma.hbm_to_vmem [thread:$0]  %s3, 1024, %s48, [#allocation6], 64, 64, 4
    $region17: #{tpu_custom_call.1} parent=1 // pred_fallthru
      _
    // Predicated region
    $region18: #{tpu_custom_call.1} parent=1 // pred_check
      _
    $region19: #{tpu_custom_call.1} parent=1 // pred_check_branch
      %55 = sbr.rel (0) target = $region21
    $region20: #{tpu_custom_call.1} parent=1 // pred_region
      _
    $region21: #{tpu_custom_call.1} parent=1 // pred_fallthru
      _
    // Predicated region
    $region22: #{tpu_custom_call.1} parent=1 // pred_check
      _
    $region23: #{tpu_custom_call.1} parent=1 // pred_check_branch
      %57 = sbr.rel (0) target = $region25
    $region24: #{tpu_custom_call.1} parent=1 // pred_region
      %s59 = ssub.s32 1024, 1024
      %60 = vsyncadd [#allocation9], %s59
      %s61 = sshll.u32 [#allocation8], 4
      %s62 = int_to_ptr.vmem [resolvable:$true] %s61
      %67 = dma.hbm_to_vmem [thread:$0]  %s5, 1024, %s62, [#allocation9], 64, 64, 4
    $region25: #{tpu_custom_call.1} parent=1 // pred_fallthru
      _
    // Predicated region
    $region26: #{tpu_custom_call.1} parent=1 // pred_check
      _
    $region27: #{tpu_custom_call.1} parent=1 // pred_check_branch
      %69 = sbr.rel (0) target = $region29
    $region28: #{tpu_custom_call.1} parent=1 // pred_region
      _
    $region29: #{tpu_custom_call.1} parent=1 // pred_fallthru
      _
    // Predicated region
    $region30: #{tpu_custom_call.1} parent=1 // pred_check
      _
    $region31: #{tpu_custom_call.1} parent=1 // pred_check_branch
      %71 = sbr.rel (0) target = $region33
    $region32: #{tpu_custom_call.1} parent=1 // pred_region
      %s73 = ssub.s32 1024, 1024
      %74 = vsyncadd [#allocation9], %s73
      %s75 = sshll.u32 [#allocation10], 4
      %s76 = int_to_ptr.vmem [resolvable:$true] %s75
      %81 = dma.hbm_to_vmem [thread:$0]  %s7, 1024, %s76, [#allocation9], 64, 64, 4
    $region33: #{tpu_custom_call.1} parent=1 // pred_fallthru
      _
    // Predicated region
    $region34: #{tpu_custom_call.1} parent=1 // pred_check
      _
    $region35: #{tpu_custom_call.1} parent=1 // pred_check_branch
      %83 = sbr.rel (0) target = $region37
    $region36: #{tpu_custom_call.1} parent=1 // pred_region
      _
    $region37: #{tpu_custom_call.1} parent=1 // pred_fallthru
      _
    // Predicated region
    $region38: #{tpu_custom_call.1} parent=1 // pred_check
      _
    $region39: #{tpu_custom_call.1} parent=1 // pred_check_branch
      %85 = sbr.rel (0) target = $region41
    $region40: #{tpu_custom_call.1} parent=1 // pred_region
      %86 = dma.done [#allocation3], 128
    $region41: #{tpu_custom_call.1} parent=1 // pred_fallthru
      _
    // Predicated region
    $region42: #{tpu_custom_call.1} parent=1 // pred_check
      _
    $region43: #{tpu_custom_call.1} parent=1 // pred_check_branch
      %88 = sbr.rel (0) target = $region45
    $region44: #{tpu_custom_call.1} parent=1 // pred_region
      %89 = dma.done [#allocation6], 1024
    $region45: #{tpu_custom_call.1} parent=1 // pred_fallthru
      _
    // Predicated region
    $region46: #{tpu_custom_call.1} parent=1 // pred_check
      _
    $region47: #{tpu_custom_call.1} parent=1 // pred_check_branch
      %91 = sbr.rel (0) target = $region49
    $region48: #{tpu_custom_call.1} parent=1 // pred_region
      %92 = dma.done [#allocation6], 1024
    $region49: #{tpu_custom_call.1} parent=1 // pred_fallthru
      _
    // Predicated region
    $region50: #{tpu_custom_call.1} parent=1 // pred_check
      _
    $region51: #{tpu_custom_call.1} parent=1 // pred_check_branch
      %94 = sbr.rel (0) target = $region53
    $region52: #{tpu_custom_call.1} parent=1 // pred_region
      %95 = dma.done [#allocation9], 1024
    $region53: #{tpu_custom_call.1} parent=1 // pred_fallthru
      _
    // Predicated region
    $region54: #{tpu_custom_call.1} parent=1 // pred_check
      _
    $region55: #{tpu_custom_call.1} parent=1 // pred_check_branch
      %97 = sbr.rel (0) target = $region57
    $region56: #{tpu_custom_call.1} parent=1 // pred_region
      %98 = dma.done [#allocation9], 1024
    $region57: #{tpu_custom_call.1} parent=1 // pred_fallthru
      _
    %v100 = vld [vmem:[#allocation2] sm:$0xff]
    %v101 = vpack.c.bf16 %v100, %v100
    %v102 = vld [vmem:[#allocation5] sm:$0xf]
    %v103 = vld [vmem:[#allocation5 + $0x4] sm:$0xf]
    %v104 = vld [vmem:[#allocation5 + $0x8] sm:$0xf]
    %v105 = vld [vmem:[#allocation5 + $0xc] sm:$0xf]
    %v106 = vld [vmem:[#allocation5 + $0x10] sm:$0xf]
    %v107 = vld [vmem:[#allocation5 + $0x14] sm:$0xf]
    %v108 = vld [vmem:[#allocation5 + $0x18] sm:$0xf]
    %v109 = vld [vmem:[#allocation5 + $0x1c] sm:$0xf]
    %v110 = vld [vmem:[#allocation5 + $0x20] sm:$0xf]
    %v111 = vld [vmem:[#allocation5 + $0x24] sm:$0xf]
    %v112 = vld [vmem:[#allocation5 + $0x28] sm:$0xf]
    %v113 = vld [vmem:[#allocation5 + $0x2c] sm:$0xf]
    %v114 = vld [vmem:[#allocation5 + $0x30] sm:$0xf]
    %v115 = vld [vmem:[#allocation5 + $0x34] sm:$0xf]
    %v116 = vld [vmem:[#allocation5 + $0x38] sm:$0xf]
    %v117 = vld [vmem:[#allocation5 + $0x3c] sm:$0xf]
    %v118 = vld [vmem:[%s2] sm:$0x1]
    %v120 = vlaneseq
    %v121 = vshrl.u32 %v120, 7
    %v122 = vsub.s32 0, %v121
    %v123 = vrot.slane %v118, %v122
    %v141 = vunpack.c.l.b16 %v102
    %v142 = vunpack.c.l.b16 %v103
    %v143 = vunpack.c.l.b16 %v104
    %v144 = vunpack.c.l.b16 %v105
    %v145 = vunpack.c.l.b16 %v106
    %v146 = vunpack.c.l.b16 %v107
    %v147 = vunpack.c.l.b16 %v108
    %v148 = vunpack.c.l.b16 %v109
    %v149 = vunpack.c.l.b16 %v110
    %v150 = vunpack.c.l.b16 %v111
    %v151 = vunpack.c.l.b16 %v112
    %v152 = vunpack.c.l.b16 %v113
    %v153 = vunpack.c.l.b16 %v114
    %v154 = vunpack.c.l.b16 %v115
    %v155 = vunpack.c.l.b16 %v116
    %v156 = vunpack.c.l.b16 %v117
    %v157 = vpack.c.b16 %v142, %v141
    %v158 = vpack.c.b16 %v144, %v143
    %v159 = vpack.c.b16 %v146, %v145
    %v160 = vpack.c.b16 %v148, %v147
    %v161 = vpack.c.b16 %v150, %v149
    %v162 = vpack.c.b16 %v152, %v151
    %v163 = vpack.c.b16 %v154, %v153
    %v164 = vpack.c.b16 %v156, %v155
    %173 = vmatprep.subr.bf16.mxu0 0
    %174 = vmatpush1.bf16.msra.mxu0 %v157
    %175 = vmatprep.subr.bf16.mxu0 0
    %176 = vmatpush1.bf16.msra.mxu0 %v158
    %177 = vmatprep.subr.bf16.mxu0 0
    %178 = vmatpush1.bf16.msra.mxu0 %v159
    %179 = vmatprep.subr.bf16.mxu0 0
    %180 = vmatpush1.bf16.msra.mxu0 %v160
    %181 = vmatprep.subr.bf16.mxu0 0
    %182 = vmatpush1.bf16.msra.mxu0 %v161
    %183 = vmatprep.subr.bf16.mxu0 0
    %184 = vmatpush1.bf16.msra.mxu0 %v162
    %185 = vmatprep.subr.bf16.mxu0 0
    %186 = vmatpush1.bf16.msra.mxu0 %v163
    %187 = vmatprep.subr.bf16.mxu0 0
    %188 = vmatpush1.bf16.msra.mxu0 %v164
    %189 = vmatprep.subr.bf16.mxu0 0
    %190 = vmatpush1.bf16.msra.mxu0 0
    %191 = vmatprep.subr.bf16.mxu0 0
    %192 = vmatpush1.bf16.msra.mxu0 0
    %193 = vmatprep.subr.bf16.mxu0 0
    %194 = vmatpush1.bf16.msra.mxu0 0
    %195 = vmatprep.subr.bf16.mxu0 0
    %196 = vmatpush1.bf16.msra.mxu0 0
    %197 = vmatprep.subr.bf16.mxu0 0
    %198 = vmatpush1.bf16.msra.mxu0 0
    %199 = vmatprep.subr.bf16.mxu0 0
    %200 = vmatpush1.bf16.msra.mxu0 0
    %201 = vmatprep.subr.bf16.mxu0 0
    %202 = vmatpush1.bf16.msra.mxu0 0
    %203 = vmatprep.subr.bf16.mxu0 0
    %204 = vmatpush1.bf16.msra.mxu0 0
    %205 = vmatprep.mubr.bf16.mxu0 0
    %206 = vmatmul.mubr.bf16.gmra.mrb[0].mxu0 %v101
    %v207 = vpop.f32.mrb[0].mxu0
    %v208 = vadd.f32 %v123, %v207
    %v209 = vpop.f32.mrb[0].mxu0
    %v210 = vpop.f32.mrb[0].mxu0
    %v211 = vpop.f32.mrb[0].mxu0
    %212 = vdwg.mxu0
    %v213 = vmul.f32 %v208, 0.5
    %v214 = vtanh.pop %v213
    %v215 = vmul.f32 %v214, 0.5
    %v216 = vadd.f32 %v215, 0.5
    %v217 = vpack.c.bf16 %v216, %v216
    %v218 = vld [vmem:[#allocation7] sm:$0xf]
    %v219 = vld [vmem:[#allocation7 + $0x4] sm:$0xf]
    %v220 = vld [vmem:[#allocation7 + $0x8] sm:$0xf]
    %v221 = vld [vmem:[#allocation7 + $0xc] sm:$0xf]
    %v222 = vld [vmem:[#allocation7 + $0x10] sm:$0xf]
    %v223 = vld [vmem:[#allocation7 + $0x14] sm:$0xf]
    %v224 = vld [vmem:[#allocation7 + $0x18] sm:$0xf]
    %v225 = vld [vmem:[#allocation7 + $0x1c] sm:$0xf]
    %v226 = vld [vmem:[#allocation7 + $0x20] sm:$0xf]
    %v227 = vld [vmem:[#allocation7 + $0x24] sm:$0xf]
    %v228 = vld [vmem:[#allocation7 + $0x28] sm:$0xf]
    %v229 = vld [vmem:[#allocation7 + $0x2c] sm:$0xf]
    %v230 = vld [vmem:[#allocation7 + $0x30] sm:$0xf]
    %v231 = vld [vmem:[#allocation7 + $0x34] sm:$0xf]
    %v232 = vld [vmem:[#allocation7 + $0x38] sm:$0xf]
    %v233 = vld [vmem:[#allocation7 + $0x3c] sm:$0xf]
    %v234 = vld [vmem:[%s4] sm:$0x1]
    %v236 = vlaneseq
    %v237 = vshrl.u32 %v236, 7
    %v238 = vsub.s32 0, %v237
    %v239 = vrot.slane %v234, %v238
    %v257 = vunpack.c.l.b16 %v218
    %v258 = vunpack.c.l.b16 %v219
    %v259 = vunpack.c.l.b16 %v220
    %v260 = vunpack.c.l.b16 %v221
    %v261 = vunpack.c.l.b16 %v222
    %v262 = vunpack.c.l.b16 %v223
    %v263 = vunpack.c.l.b16 %v224
    %v264 = vunpack.c.l.b16 %v225
    %v265 = vunpack.c.l.b16 %v226
    %v266 = vunpack.c.l.b16 %v227
    %v267 = vunpack.c.l.b16 %v228
    %v268 = vunpack.c.l.b16 %v229
    %v269 = vunpack.c.l.b16 %v230
    %v270 = vunpack.c.l.b16 %v231
    %v271 = vunpack.c.l.b16 %v232
    %v272 = vunpack.c.l.b16 %v233
    %v273 = vpack.c.b16 %v258, %v257
    %v274 = vpack.c.b16 %v260, %v259
    %v275 = vpack.c.b16 %v262, %v261
    %v276 = vpack.c.b16 %v264, %v263
    %v277 = vpack.c.b16 %v266, %v265
    %v278 = vpack.c.b16 %v268, %v267
    %v279 = vpack.c.b16 %v270, %v269
    %v280 = vpack.c.b16 %v272, %v271
    %289 = vmatprep.subr.bf16.mxu0 0
    %290 = vmatpush1.bf16.msra.mxu0 %v273
    %291 = vmatprep.subr.bf16.mxu0 0
    %292 = vmatpush1.bf16.msra.mxu0 %v274
    %293 = vmatprep.subr.bf16.mxu0 0
    %294 = vmatpush1.bf16.msra.mxu0 %v275
    %295 = vmatprep.subr.bf16.mxu0 0
    %296 = vmatpush1.bf16.msra.mxu0 %v276
    %297 = vmatprep.subr.bf16.mxu0 0
    %298 = vmatpush1.bf16.msra.mxu0 %v277
    %299 = vmatprep.subr.bf16.mxu0 0
    %300 = vmatpush1.bf16.msra.mxu0 %v278
    %301 = vmatprep.subr.bf16.mxu0 0
    %302 = vmatpush1.bf16.msra.mxu0 %v279
    %303 = vmatprep.subr.bf16.mxu0 0
    %304 = vmatpush1.bf16.msra.mxu0 %v280
    %305 = vmatprep.subr.bf16.mxu0 0
    %306 = vmatpush1.bf16.msra.mxu0 0
    %307 = vmatprep.subr.bf16.mxu0 0
    %308 = vmatpush1.bf16.msra.mxu0 0
    %309 = vmatprep.subr.bf16.mxu0 0
    %310 = vmatpush1.bf16.msra.mxu0 0
    %311 = vmatprep.subr.bf16.mxu0 0
    %312 = vmatpush1.bf16.msra.mxu0 0
    %313 = vmatprep.subr.bf16.mxu0 0
    %314 = vmatpush1.bf16.msra.mxu0 0
    %315 = vmatprep.subr.bf16.mxu0 0
    %316 = vmatpush1.bf16.msra.mxu0 0
    %317 = vmatprep.subr.bf16.mxu0 0
    %318 = vmatpush1.bf16.msra.mxu0 0
    %319 = vmatprep.subr.bf16.mxu0 0
    %320 = vmatpush1.bf16.msra.mxu0 0
    %321 = vmatprep.mubr.bf16.mxu0 0
    %322 = vmatmul.mubr.bf16.gmra.mrb[0].mxu0 %v217
    %v323 = vpop.f32.mrb[0].mxu0
    %v324 = vadd.f32 %v239, %v323
    %v325 = vpop.f32.mrb[0].mxu0
    %v326 = vpop.f32.mrb[0].mxu0
    %v327 = vpop.f32.mrb[0].mxu0
    %328 = vdwg.mxu0
    %v329 = vmul.f32 %v324, 0.5
    %v330 = vtanh.pop %v329
    %v331 = vmul.f32 %v330, 0.5
    %v332 = vadd.f32 %v331, 0.5
    %v333 = vpack.c.bf16 %v332, %v332
    %v334 = vld [vmem:[#allocation8] sm:$0xf]
    %v335 = vld [vmem:[#allocation8 + $0x4] sm:$0xf]
    %v336 = vld [vmem:[#allocation8 + $0x8] sm:$0xf]
    %v337 = vld [vmem:[#allocation8 + $0xc] sm:$0xf]
    %v338 = vld [vmem:[#allocation8 + $0x10] sm:$0xf]
    %v339 = vld [vmem:[#allocation8 + $0x14] sm:$0xf]
    %v340 = vld [vmem:[#allocation8 + $0x18] sm:$0xf]
    %v341 = vld [vmem:[#allocation8 + $0x1c] sm:$0xf]
    %v342 = vld [vmem:[#allocation8 + $0x20] sm:$0xf]
    %v343 = vld [vmem:[#allocation8 + $0x24] sm:$0xf]
    %v344 = vld [vmem:[#allocation8 + $0x28] sm:$0xf]
    %v345 = vld [vmem:[#allocation8 + $0x2c] sm:$0xf]
    %v346 = vld [vmem:[#allocation8 + $0x30] sm:$0xf]
    %v347 = vld [vmem:[#allocation8 + $0x34] sm:$0xf]
    %v348 = vld [vmem:[#allocation8 + $0x38] sm:$0xf]
    %v349 = vld [vmem:[#allocation8 + $0x3c] sm:$0xf]
    %v350 = vld [vmem:[%s6] sm:$0x1]
    %v352 = vlaneseq
    %v353 = vshrl.u32 %v352, 7
    %v354 = vsub.s32 0, %v353
    %v355 = vrot.slane %v350, %v354
    %v373 = vunpack.c.l.b16 %v334
    %v374 = vunpack.c.l.b16 %v335
    %v375 = vunpack.c.l.b16 %v336
    %v376 = vunpack.c.l.b16 %v337
    %v377 = vunpack.c.l.b16 %v338
    %v378 = vunpack.c.l.b16 %v339
    %v379 = vunpack.c.l.b16 %v340
    %v380 = vunpack.c.l.b16 %v341
    %v381 = vunpack.c.l.b16 %v342
    %v382 = vunpack.c.l.b16 %v343
    %v383 = vunpack.c.l.b16 %v344
    %v384 = vunpack.c.l.b16 %v345
    %v385 = vunpack.c.l.b16 %v346
    %v386 = vunpack.c.l.b16 %v347
    %v387 = vunpack.c.l.b16 %v348
    %v388 = vunpack.c.l.b16 %v349
    %v389 = vpack.c.b16 %v374, %v373
    %v390 = vpack.c.b16 %v376, %v375
    %v391 = vpack.c.b16 %v378, %v377
    %v392 = vpack.c.b16 %v380, %v379
    %v393 = vpack.c.b16 %v382, %v381
    %v394 = vpack.c.b16 %v384, %v383
    %v395 = vpack.c.b16 %v386, %v385
    %v396 = vpack.c.b16 %v388, %v387
    %405 = vmatprep.subr.bf16.mxu0 0
    %406 = vmatpush1.bf16.msra.mxu0 %v389
    %407 = vmatprep.subr.bf16.mxu0 0
    %408 = vmatpush1.bf16.msra.mxu0 %v390
    %409 = vmatprep.subr.bf16.mxu0 0
    %410 = vmatpush1.bf16.msra.mxu0 %v391
    %411 = vmatprep.subr.bf16.mxu0 0
    %412 = vmatpush1.bf16.msra.mxu0 %v392
    %413 = vmatprep.subr.bf16.mxu0 0
    %414 = vmatpush1.bf16.msra.mxu0 %v393
    %415 = vmatprep.subr.bf16.mxu0 0
    %416 = vmatpush1.bf16.msra.mxu0 %v394
    %417 = vmatprep.subr.bf16.mxu0 0
    %418 = vmatpush1.bf16.msra.mxu0 %v395
    %419 = vmatprep.subr.bf16.mxu0 0
    %420 = vmatpush1.bf16.msra.mxu0 %v396
    %421 = vmatprep.subr.bf16.mxu0 0
    %422 = vmatpush1.bf16.msra.mxu0 0
    %423 = vmatprep.subr.bf16.mxu0 0
    %424 = vmatpush1.bf16.msra.mxu0 0
    %425 = vmatprep.subr.bf16.mxu0 0
    %426 = vmatpush1.bf16.msra.mxu0 0
    %427 = vmatprep.subr.bf16.mxu0 0
    %428 = vmatpush1.bf16.msra.mxu0 0
    %429 = vmatprep.subr.bf16.mxu0 0
    %430 = vmatpush1.bf16.msra.mxu0 0
    %431 = vmatprep.subr.bf16.mxu0 0
    %432 = vmatpush1.bf16.msra.mxu0 0
    %433 = vmatprep.subr.bf16.mxu0 0
    %434 = vmatpush1.bf16.msra.mxu0 0
    %435 = vmatprep.subr.bf16.mxu0 0
    %436 = vmatpush1.bf16.msra.mxu0 0
    %437 = vmatprep.mubr.bf16.mxu0 0
    %438 = vmatmul.mubr.bf16.gmra.mrb[0].mxu0 %v333
    %v439 = vpop.f32.mrb[0].mxu0
    %v440 = vadd.f32 %v355, %v439
    %v441 = vpop.f32.mrb[0].mxu0
    %v442 = vpop.f32.mrb[0].mxu0
    %v443 = vpop.f32.mrb[0].mxu0
    %444 = vdwg.mxu0
    %v445 = vmul.f32 %v440, 0.5
    %v446 = vtanh.pop %v445
    %v447 = vmul.f32 %v446, 0.5
    %v448 = vadd.f32 %v447, 0.5
    %v449 = vpack.c.bf16 %v448, %v448
    %v450 = vld [vmem:[#allocation10] sm:$0xf]
    %v451 = vld [vmem:[#allocation10 + $0x4] sm:$0xf]
    %v452 = vld [vmem:[#allocation10 + $0x8] sm:$0xf]
    %v453 = vld [vmem:[#allocation10 + $0xc] sm:$0xf]
    %v454 = vld [vmem:[#allocation10 + $0x10] sm:$0xf]
    %v455 = vld [vmem:[#allocation10 + $0x14] sm:$0xf]
    %v456 = vld [vmem:[#allocation10 + $0x18] sm:$0xf]
    %v457 = vld [vmem:[#allocation10 + $0x1c] sm:$0xf]
    %v458 = vld [vmem:[#allocation10 + $0x20] sm:$0xf]
    %v459 = vld [vmem:[#allocation10 + $0x24] sm:$0xf]
    %v460 = vld [vmem:[#allocation10 + $0x28] sm:$0xf]
    %v461 = vld [vmem:[#allocation10 + $0x2c] sm:$0xf]
    %v462 = vld [vmem:[#allocation10 + $0x30] sm:$0xf]
    %v463 = vld [vmem:[#allocation10 + $0x34] sm:$0xf]
    %v464 = vld [vmem:[#allocation10 + $0x38] sm:$0xf]
    %v465 = vld [vmem:[#allocation10 + $0x3c] sm:$0xf]
    %v466 = vld [vmem:[%s8] sm:$0x1]
    %v468 = vlaneseq
    %v469 = vshrl.u32 %v468, 7
    %v470 = vsub.s32 0, %v469
    %v471 = vrot.slane %v466, %v470
    %v489 = vunpack.c.l.b16 %v450
    %v490 = vunpack.c.l.b16 %v451
    %v491 = vunpack.c.l.b16 %v452
    %v492 = vunpack.c.l.b16 %v453
    %v493 = vunpack.c.l.b16 %v454
    %v494 = vunpack.c.l.b16 %v455
    %v495 = vunpack.c.l.b16 %v456
    %v496 = vunpack.c.l.b16 %v457
    %v497 = vunpack.c.l.b16 %v458
    %v498 = vunpack.c.l.b16 %v459
    %v499 = vunpack.c.l.b16 %v460
    %v500 = vunpack.c.l.b16 %v461
    %v501 = vunpack.c.l.b16 %v462
    %v502 = vunpack.c.l.b16 %v463
    %v503 = vunpack.c.l.b16 %v464
    %v504 = vunpack.c.l.b16 %v465
    %v505 = vpack.c.b16 %v490, %v489
    %v506 = vpack.c.b16 %v492, %v491
    %v507 = vpack.c.b16 %v494, %v493
    %v508 = vpack.c.b16 %v496, %v495
    %v509 = vpack.c.b16 %v498, %v497
    %v510 = vpack.c.b16 %v500, %v499
    %v511 = vpack.c.b16 %v502, %v501
    %v512 = vpack.c.b16 %v504, %v503
    %521 = vmatprep.subr.bf16.mxu0 0
    %522 = vmatpush1.bf16.msra.mxu0 %v505
    %523 = vmatprep.subr.bf16.mxu0 0
    %524 = vmatpush1.bf16.msra.mxu0 %v506
    %525 = vmatprep.subr.bf16.mxu0 0
    %526 = vmatpush1.bf16.msra.mxu0 %v507
    %527 = vmatprep.subr.bf16.mxu0 0
    %528 = vmatpush1.bf16.msra.mxu0 %v508
    %529 = vmatprep.subr.bf16.mxu0 0
    %530 = vmatpush1.bf16.msra.mxu0 %v509
    %531 = vmatprep.subr.bf16.mxu0 0
    %532 = vmatpush1.bf16.msra.mxu0 %v510
    %533 = vmatprep.subr.bf16.mxu0 0
    %534 = vmatpush1.bf16.msra.mxu0 %v511
    %535 = vmatprep.subr.bf16.mxu0 0
    %536 = vmatpush1.bf16.msra.mxu0 %v512
    %537 = vmatprep.subr.bf16.mxu0 0
    %538 = vmatpush1.bf16.msra.mxu0 0
    %539 = vmatprep.subr.bf16.mxu0 0
    %540 = vmatpush1.bf16.msra.mxu0 0
    %541 = vmatprep.subr.bf16.mxu0 0
    %542 = vmatpush1.bf16.msra.mxu0 0
    %543 = vmatprep.subr.bf16.mxu0 0
    %544 = vmatpush1.bf16.msra.mxu0 0
    %545 = vmatprep.subr.bf16.mxu0 0
    %546 = vmatpush1.bf16.msra.mxu0 0
    %547 = vmatprep.subr.bf16.mxu0 0
    %548 = vmatpush1.bf16.msra.mxu0 0
    %549 = vmatprep.subr.bf16.mxu0 0
    %550 = vmatpush1.bf16.msra.mxu0 0
    %551 = vmatprep.subr.bf16.mxu0 0
    %552 = vmatpush1.bf16.msra.mxu0 0
    %553 = vmatprep.mubr.bf16.mxu0 0
    %554 = vmatmul.mubr.bf16.gmra.mrb[0].mxu0 %v449
    %v555 = vpop.f32.mrb[0].mxu0
    %v556 = vadd.f32 %v471, %v555
    %v557 = vpop.f32.mrb[0].mxu0
    %v558 = vpop.f32.mrb[0].mxu0
    %v559 = vpop.f32.mrb[0].mxu0
    %560 = vdwg.mxu0
    %561 = vst [vmem:[#allocation11] sm:$0xff] %v556
    // Predicated region
    $region58: #{tpu_custom_call.1} parent=1 // pred_check
      _
    $region59: #{tpu_custom_call.1} parent=1 // pred_check_branch
      %563 = sbr.rel (0) target = $region61
    $region60: #{tpu_custom_call.1} parent=1 // pred_region
      %s565 = ssub.s32 128, 128
      %566 = vsyncadd [#allocation4], %s565
      %s568 = sshll.u32 [#allocation11], 4
      %s569 = int_to_ptr.vmem [resolvable:$true] %s568
      %571 = dma.vmem_to_hbm [thread:$0]  %s569, 128, %s9, [#allocation4]
    $region61: #{tpu_custom_call.1} parent=1 // pred_fallthru
      _
    // Predicated region
    $region62: #{tpu_custom_call.1} parent=1 // pred_check
      _
    $region63: #{tpu_custom_call.1} parent=1 // pred_check_branch
      %573 = sbr.rel (0) target = $region65
    $region64: #{tpu_custom_call.1} parent=1 // pred_region
      %574 = dma.done [#allocation4], 128
    $region65: #{tpu_custom_call.1} parent=1 // pred_fallthru
      _
    %575 = vsyncpa [#allocation3], 1
    %576 = vsyncpa [#allocation6], 1
    %577 = vsyncpa [#allocation9], 1
    %578 = vsyncpa [#allocation4], 1

</llo_original>
